<compile_context>
chip_gen: v7x
topology: tpu7x:2x2x1
jax: 0.10.0
libtpu: 0.0.40
codegen_flags: <defaults>
</compile_context>

<pallas_src>
import functools

import numpy as np
import jax
import jax.numpy as jnp
from jax.experimental import pallas as pl
from jax.experimental.pallas import tpu as pltpu


def down_block_ref(x, scale):
    """Pure-JAX reference with identical semantics to the PyTorch module."""
    n, c, h, w = x.shape
    x = x.reshape(n, c, h // scale, scale, w // scale, scale)
    x = jnp.transpose(x, (0, 3, 5, 1, 2, 4))
    return x.reshape(n, c * scale * scale, h // scale, w // scale)


def _build_sel(scale, w_tile, w_out_t, dtype):
    """One-hot de-interleave selectors: sel[sw, ow*scale + sw, ow] = 1."""
    sel = np.zeros((scale, w_tile, w_out_t), dtype=np.float32)
    ow = np.arange(w_out_t)
    for sw in range(scale):
        sel[sw, ow * scale + sw, ow] = 1.0
    return jnp.asarray(sel, dtype=dtype)


def _pick_tile_h(h_out, row_bytes, sublane, budget):
    """Sublane-aligned height tile whose input block fits the VMEM budget."""
    cap = max(sublane, budget // max(1, row_bytes))
    if h_out <= cap:
        return h_out                                   # full dim: always legal
    cap = max(sublane, (cap // sublane) * sublane)
    best_div = None
    for th in range(cap, sublane - 1, -sublane):       # prefer exact divisors
        if h_out % th == 0:
            best_div = th
            break
    if best_div is not None and 2 * best_div >= cap:
        return best_div                                # no masked edge block
    return cap                                         # cdiv grid, edge block masked


def _make_kernel(c, scale, tile_h, w_tile, w_out_t, cast_f32, precision, sh_in_grid):
    """sel_ref: (scale, w_tile, w_out_t) resident one-hot selectors.
       sh_in_grid=True : x_ref (c, tile_h, w_tile), o_ref (scale*c, tile_h, w_out_t)
       sh_in_grid=False: x_ref (c, tile_h, scale*w_tile), o_ref (scale^2*c, tile_h, w_out_t)
    """
    def kernel(sel_ref, x_ref, o_ref):
        def deinterleave(xs, ch_base):
            # xs: (c*tile_h, w_tile) with lanes ordered (ow, sw) interleaved.
            for sw in range(scale):                     # tiny static unroll
                g = jnp.dot(xs, sel_ref[sw],
                            preferred_element_type=jnp.float32,
                            precision=precision)        # (c*tile_h, w_out_t)
                o_ref[(ch_base + sw) * c:(ch_base + sw + 1) * c] = (
                    g.reshape(c, tile_h, w_out_t).astype(o_ref.dtype))

        if sh_in_grid:
            xs = x_ref[...].reshape(c * tile_h, w_tile)
            if cast_f32:
                xs = xs.astype(jnp.float32)             # no-op for f32, exact for f16
            deinterleave(xs, 0)
        else:
            for sh in range(scale):
                xs = x_ref[:, :, sh * w_tile:(sh + 1) * w_tile]
                xs = xs.reshape(c * tile_h, w_tile)
                if cast_f32:
                    xs = xs.astype(jnp.float32)
                deinterleave(xs, sh * scale)
    return kernel


@functools.partial(jax.jit, static_argnums=(1,))
def down_block(x, scale):
    """Pallas DownBlock.forward: (n, c, h, w) NCHW -> (n, c*scale^2, h/scale, w/scale)."""
    n, c, h, w = x.shape
    assert h % scale == 0 and w % scale == 0
    h_out, w_out = h // scale, w // scale
    c_out = c * scale * scale

    if not jnp.issubdtype(x.dtype, jnp.floating):
        # TODO(synk): integer inputs would need a gather-based de-interleave (the
        # one-hot MXU path is only exact for floats); use the XLA reshape path.
        return down_block_ref(x, scale)

    dtype = jnp.dtype(x.dtype)
    itemsize = dtype.itemsize

    # Exact selection on the MXU, dtype-aware (review: bf16 sel, no forced f32 cast).
    if dtype == jnp.bfloat16:
        sel_dtype, cast_f32, precision = jnp.bfloat16, False, None
    else:   # float32 / float16: select in f32 at HIGHEST precision (exact)
        sel_dtype, cast_f32, precision = jnp.float32, True, jax.lax.Precision.HIGHEST

    # --- VMEM budgeting per generation (64 MiB/TC on v7x, 128 MiB on v5e/v6e) ---
    try:
        vmem_cap = int(pltpu.get_tpu_info().vmem_capacity_bytes)
    except Exception:
        vmem_cap = 64 * 1024 * 1024                    # conservative (v7x) fallback
    vmem_limit = int(min(0.75 * vmem_cap, 96 * 1024 * 1024))
    # Per step: ~2x input block + ~2x (equal-sized) output block + f32 dot outputs + sel.
    block_budget = max(1, vmem_limit // 6)
    sublane = {4: 8, 2: 16, 1: 32}.get(itemsize, 8)

    lane_tile = scale * 128
    sh_in_grid = (w % lane_tile == 0)                  # width-tiled fast path
    if sh_in_grid:
        w_tile, w_out_t = lane_tile, 128
        n_w = w // w_tile
        in_row_bytes = c * w_tile * itemsize
    else:
        # Small/odd widths: full-width blocks, sh handled inside the kernel.
        # (If w_out < 128 the output stores are lane-masked; unavoidable here.)
        w_tile, w_out_t = w, w_out
        n_w = 1
        in_row_bytes = c * scale * w * itemsize

    tile_h = _pick_tile_h(h_out, in_row_bytes, sublane, block_budget)
    n_h = pl.cdiv(h_out, tile_h)

    # Free adjacent-dim reshape: the `scale` input rows feeding one output row become
    # one lane-contiguous slab of length scale*w, ordered (sh, ow, sw).
    x_r = x.reshape(n, c, h_out, scale * w)

    sel = _build_sel(scale, w_tile, w_out_t, sel_dtype)
    kernel = _make_kernel(c, scale, tile_h, w_tile, w_out_t,
                          cast_f32, precision, sh_in_grid)

    if sh_in_grid:
        grid = (n, scale, n_h, n_w)
        in_specs = [
            # Resident constant (constant index map -> fetched once).
            pl.BlockSpec((scale, w_tile, w_out_t), lambda i, sh, j, k: (0, 0, 0)),
            # Input rows oh*scale + sh of width tile k (lane block sh*n_w + k).
            pl.BlockSpec((None, c, tile_h, w_tile),
                         lambda i, sh, j, k: (i, 0, j, sh * n_w + k)),
        ]
        # Channel-contiguous output block [(sh*scale)*c, (sh*scale + scale)*c).
        out_specs = pl.BlockSpec((None, scale * c, tile_h, w_out_t),
                                 lambda i, sh, j, k: (i, sh, j, k))
    else:
        grid = (n, n_h)
        in_specs = [
            pl.BlockSpec((scale, w_tile, w_out_t), lambda i, j: (0, 0, 0)),
            pl.BlockSpec((None, c, tile_h, scale * w), lambda i, j: (i, 0, j, 0)),
        ]
        out_specs = pl.BlockSpec((None, c_out, tile_h, w_out),
                                 lambda i, j: (i, 0, j, 0))

    flops = 2 * n * c * h * w * w_tile                 # one-hot MACs
    bytes_accessed = 2 * n * c * h * w * itemsize + sel.size * sel.dtype.itemsize

    out = pl.pallas_call(
        kernel,
        out_shape=jax.ShapeDtypeStruct((n, c_out, h_out, w_out), x.dtype),
        grid=grid,
        in_specs=in_specs,
        out_specs=out_specs,
        compiler_params=pltpu.CompilerParams(
            dimension_semantics=("parallel",) * len(grid),
            vmem_limit_bytes=vmem_limit,
        ),
        cost_estimate=pl.CostEstimate(
            flops=flops, transcendentals=0, bytes_accessed=bytes_accessed),
    )(sel, x_r)
    return out


if __name__ == "__main__":
    scale = 2
    key = jax.random.PRNGKey(0)

    # Small NCHW demo shape (full-width fallback path, w < scale*128).
    x = jax.random.normal(key, (2, 4, 16, 16), dtype=jnp.float32)
    out = jax.block_until_ready(down_block(x, scale))
    ref = down_block_ref(x, scale)
    assert out.shape == (2, 4 * scale * scale, 8, 8), out.shape
    assert out.dtype == x.dtype
    assert jnp.allclose(out, ref, atol=1e-5, rtol=1e-5), "Pallas output != reference"

    # Width-tiled fast path (w % (scale*128) == 0): lane-dense 128-wide output blocks.
    x2 = jax.random.normal(jax.random.PRNGKey(0), (1, 2, 16, 256), dtype=jnp.float32)
    out2 = jax.block_until_ready(down_block(x2, scale))
    assert jnp.allclose(out2, down_block_ref(x2, scale), atol=1e-5, rtol=1e-5)

    # Native bf16 path (single MXU pass, selection is exact in bf16).
    x3 = x2.astype(jnp.bfloat16)
    out3 = jax.block_until_ready(down_block(x3, scale))
    assert out3.dtype == jnp.bfloat16
    assert jnp.array_equal(out3, down_block_ref(x3, scale))

    print("KERNEL_OK")
</pallas_src>

<mosaic_0001>
module attributes {stable_mosaic.version = 11 : i64} {
  func.func @kernel(%arg0: i32, %arg1: i32, %arg2: memref<2x16x8xf32, #tpu.memory_space<vmem>>, %arg3: memref<1x4x8x32xf32, #tpu.memory_space<vmem>>, %arg4: memref<1x16x8x8xf32, #tpu.memory_space<vmem>>) attributes {dimension_semantics = [#tpu.dimension_semantics<parallel>, #tpu.dimension_semantics<parallel>], iteration_bounds = array<i64: 2, 1>, scalar_prefetch = 0 : i64, scratch_operands = 0 : i64, tpu.core_type = #tpu.core_type<tc>, window_params = [{pipeline_mode = #tpu.pipeline_mode<synchronous>, transform_indices = @transform_0, window_bounds = array<i64: 2, 16, 8>}, {transform_indices = @transform_1, window_bounds = array<i64: 1, 4, 8, 32>}, {transform_indices = @transform_2, window_bounds = array<i64: 1, 16, 8, 8>}]} {
    %c0 = arith.constant 0 : index
    %c0_0 = arith.constant 0 : index
    %c0_1 = arith.constant 0 : index
    %c0_2 = arith.constant 0 : index
    %0 = vector.load %arg3[%c0, %c0_0, %c0_1, %c0_2] : memref<1x4x8x32xf32, #tpu.memory_space<vmem>>, vector<1x4x8x16xf32>
    %1 = vector.shape_cast %0 : vector<1x4x8x16xf32> to vector<4x8x16xf32>
    %2 = vector.shape_cast %1 : vector<4x8x16xf32> to vector<32x16xf32>
    %c0_3 = arith.constant 0 : index
    %c0_4 = arith.constant 0 : index
    %c0_5 = arith.constant 0 : index
    %3 = vector.load %arg2[%c0_3, %c0_4, %c0_5] : memref<2x16x8xf32, #tpu.memory_space<vmem>>, vector<1x16x8xf32>
    %4 = vector.shape_cast %3 : vector<1x16x8xf32> to vector<16x8xf32>
    %cst = arith.constant dense<0.000000e+00> : vector<32x8xf32>
    %5 = tpu.matmul %2, %4, %cst {dimension_numbers = #tpu.dot_dimension_numbers<[1], [0], [0], [1], [0, 0, 1, 1], [], []>, precision = #tpu.contract_precision<fp32>} : vector<32x16xf32>, vector<16x8xf32>, vector<32x8xf32> -> vector<32x8xf32>
    %6 = vector.shape_cast %5 : vector<32x8xf32> to vector<4x8x8xf32>
    %c0_6 = arith.constant 0 : index
    %c0_7 = arith.constant 0 : index
    %c0_8 = arith.constant 0 : index
    %c0_9 = arith.constant 0 : index
    %7 = vector.load %arg4[%c0_6, %c0_7, %c0_8, %c0_9] : memref<1x16x8x8xf32, #tpu.memory_space<vmem>>, vector<1x4x8x8xf32>
    %8 = vector.shape_cast %7 : vector<1x4x8x8xf32> to vector<4x8x8xf32>
    %9 = vector.shape_cast %6 : vector<4x8x8xf32> to vector<1x4x8x8xf32>
    tpu.vector_store %arg4[%c0_6, %c0_7, %c0_8, %c0_9], %9 {strides = array<i32>} : memref<1x16x8x8xf32, #tpu.memory_space<vmem>>, vector<1x4x8x8xf32>,
    %c1 = arith.constant 1 : index
    %c0_10 = arith.constant 0 : index
    %c0_11 = arith.constant 0 : index
    %10 = vector.load %arg2[%c1, %c0_10, %c0_11] : memref<2x16x8xf32, #tpu.memory_space<vmem>>, vector<1x16x8xf32>
    %11 = vector.shape_cast %10 : vector<1x16x8xf32> to vector<16x8xf32>
    %cst_12 = arith.constant dense<0.000000e+00> : vector<32x8xf32>
    %12 = tpu.matmul %2, %11, %cst_12 {dimension_numbers = #tpu.dot_dimension_numbers<[1], [0], [0], [1], [0, 0, 1, 1], [], []>, precision = #tpu.contract_precision<fp32>} : vector<32x16xf32>, vector<16x8xf32>, vector<32x8xf32> -> vector<32x8xf32>
    %13 = vector.shape_cast %12 : vector<32x8xf32> to vector<4x8x8xf32>
    %c0_13 = arith.constant 0 : index
    %c4 = arith.constant 4 : index
    %c0_14 = arith.constant 0 : index
    %c0_15 = arith.constant 0 : index
    %14 = vector.load %arg4[%c0_13, %c4, %c0_14, %c0_15] : memref<1x16x8x8xf32, #tpu.memory_space<vmem>>, vector<1x4x8x8xf32>
    %15 = vector.shape_cast %14 : vector<1x4x8x8xf32> to vector<4x8x8xf32>
    %16 = vector.shape_cast %13 : vector<4x8x8xf32> to vector<1x4x8x8xf32>
    tpu.vector_store %arg4[%c0_13, %c4, %c0_14, %c0_15], %16 {strides = array<i32>} : memref<1x16x8x8xf32, #tpu.memory_space<vmem>>, vector<1x4x8x8xf32>,
    %c0_16 = arith.constant 0 : index
    %c0_17 = arith.constant 0 : index
    %c0_18 = arith.constant 0 : index
    %c16 = arith.constant 16 : index
    %17 = vector.load %arg3[%c0_16, %c0_17, %c0_18, %c16] : memref<1x4x8x32xf32, #tpu.memory_space<vmem>>, vector<1x4x8x16xf32>
    %18 = vector.shape_cast %17 : vector<1x4x8x16xf32> to vector<4x8x16xf32>
    %19 = vector.shape_cast %18 : vector<4x8x16xf32> to vector<32x16xf32>
    %c0_19 = arith.constant 0 : index
    %c0_20 = arith.constant 0 : index
    %c0_21 = arith.constant 0 : index
    %20 = vector.load %arg2[%c0_19, %c0_20, %c0_21] : memref<2x16x8xf32, #tpu.memory_space<vmem>>, vector<1x16x8xf32>
    %21 = vector.shape_cast %20 : vector<1x16x8xf32> to vector<16x8xf32>
    %cst_22 = arith.constant dense<0.000000e+00> : vector<32x8xf32>
    %22 = tpu.matmul %19, %21, %cst_22 {dimension_numbers = #tpu.dot_dimension_numbers<[1], [0], [0], [1], [0, 0, 1, 1], [], []>, precision = #tpu.contract_precision<fp32>} : vector<32x16xf32>, vector<16x8xf32>, vector<32x8xf32> -> vector<32x8xf32>
    %23 = vector.shape_cast %22 : vector<32x8xf32> to vector<4x8x8xf32>
    %c0_23 = arith.constant 0 : index
    %c8 = arith.constant 8 : index
    %c0_24 = arith.constant 0 : index
    %c0_25 = arith.constant 0 : index
    %24 = vector.load %arg4[%c0_23, %c8, %c0_24, %c0_25] : memref<1x16x8x8xf32, #tpu.memory_space<vmem>>, vector<1x4x8x8xf32>
    %25 = vector.shape_cast %24 : vector<1x4x8x8xf32> to vector<4x8x8xf32>
    %26 = vector.shape_cast %23 : vector<4x8x8xf32> to vector<1x4x8x8xf32>
    tpu.vector_store %arg4[%c0_23, %c8, %c0_24, %c0_25], %26 {strides = array<i32>} : memref<1x16x8x8xf32, #tpu.memory_space<vmem>>, vector<1x4x8x8xf32>,
    %c1_26 = arith.constant 1 : index
    %c0_27 = arith.constant 0 : index
    %c0_28 = arith.constant 0 : index
    %27 = vector.load %arg2[%c1_26, %c0_27, %c0_28] : memref<2x16x8xf32, #tpu.memory_space<vmem>>, vector<1x16x8xf32>
    %28 = vector.shape_cast %27 : vector<1x16x8xf32> to vector<16x8xf32>
    %cst_29 = arith.constant dense<0.000000e+00> : vector<32x8xf32>
    %29 = tpu.matmul %19, %28, %cst_29 {dimension_numbers = #tpu.dot_dimension_numbers<[1], [0], [0], [1], [0, 0, 1, 1], [], []>, precision = #tpu.contract_precision<fp32>} : vector<32x16xf32>, vector<16x8xf32>, vector<32x8xf32> -> vector<32x8xf32>
    %30 = vector.shape_cast %29 : vector<32x8xf32> to vector<4x8x8xf32>
    %c0_30 = arith.constant 0 : index
    %c12 = arith.constant 12 : index
    %c0_31 = arith.constant 0 : index
    %c0_32 = arith.constant 0 : index
    %31 = vector.load %arg4[%c0_30, %c12, %c0_31, %c0_32] : memref<1x16x8x8xf32, #tpu.memory_space<vmem>>, vector<1x4x8x8xf32>
    %32 = vector.shape_cast %31 : vector<1x4x8x8xf32> to vector<4x8x8xf32>
    %33 = vector.shape_cast %30 : vector<4x8x8xf32> to vector<1x4x8x8xf32>
    tpu.vector_store %arg4[%c0_30, %c12, %c0_31, %c0_32], %33 {strides = array<i32>} : memref<1x16x8x8xf32, #tpu.memory_space<vmem>>, vector<1x4x8x8xf32>,
    return
  }
  func.func @transform_0(%arg0: i32, %arg1: i32) -> (i32, i32, i32) {
    %c0_i32 = arith.constant 0 : i32
    %c0_i32_0 = arith.constant 0 : i32
    %c0_i32_1 = arith.constant 0 : i32
    %c0_i32_2 = arith.constant 0 : i32
    return %c0_i32, %c0_i32_0, %c0_i32_1 : i32, i32, i32
  }
  func.func @transform_1(%arg0: i32, %arg1: i32) -> (i32, i32, i32, i32) {
    %c0_i32 = arith.constant 0 : i32
    %c0_i32_0 = arith.constant 0 : i32
    %c0_i32_1 = arith.constant 0 : i32
    return %arg0, %c0_i32, %arg1, %c0_i32_0 : i32, i32, i32, i32
  }
  func.func @transform_2(%arg0: i32, %arg1: i32) -> (i32, i32, i32, i32) {
    %c0_i32 = arith.constant 0 : i32
    %c0_i32_0 = arith.constant 0 : i32
    %c0_i32_1 = arith.constant 0 : i32
    return %arg0, %c0_i32, %arg1, %c0_i32_0 : i32, i32, i32, i32
  }
}

</mosaic_0001>

<llo_original>
// kernel: down_block.1
$region0: #{down_block.1}
  #allocation0 [shape = 'u32[]', space=smem, size = 0x4, offset = 0x4, fixed_abs, tag = 'smem constant byte address 0x4 - core index']
  #allocation1 [shape = 'u32[144,128]{1,0:T(1,128)}', space=vmem, size = 0x12000, scoped, tag = 'internal scratch']
  %s0 = inlined_call_operand.vmem [shape: f32[2,16,8], index: 0, kind: input, shape index: {}]
  %s1 = inlined_call_operand.vmem [shape: f32[2,4,8,32], index: 1, kind: input, shape index: {}]
  %s2 = inlined_call_operand.vmem [shape: f32[2,16,8,8], index: 2, kind: output, shape index: {}]
  %s3 = sld [smem:[#allocation0]]
  $region41: #{down_block.1} parent=0
    _
  %s5 = ssub.s32 1, %s3
  %s6 = scalar_select 0, %s5, %s3
  loop: start=0, step=1, limit=4
  $region2: #{down_block.1} parent=0 // loop_pre_header
    _
  $region3: #{down_block.1} parent=0 // loop_header
    %s8 = sphi 0, %s12
    %p9 = scmp.ge.s32.totalorder %s8, 4
    %s15 = sphi 0, %s27
    %s16 = sphi 0, %s23
    %s17 = sphi 0, %s15
    %s18 = sphi 0, %s16
    %s19 = sphi 0, %s17
    %s20 = sphi 0, %s18
    %s28 = sphi 0, %s28
    %s30 = sphi 0, %s28
    %s31 = sphi 0, %s30
    %s45 = sphi 0, %s31
    %s53 = sphi 0, %s55
    %s56 = sphi 0, %s53
    %s57 = sphi 0, %s56
    %s73 = sphi 0, %s57
    %s81 = sphi 0, %s83
    %s84 = sphi 0, %s81
    %s85 = sphi 0, %s84
    %s101 = sphi 0, %s85
  $region4: #{down_block.1} parent=0 // loop_header_branch
    %11 = sbr.rel (%p9) target = $region8
  $region5: #{down_block.1} parent=0 // loop_body
    %s13 = ssub.s32 %s8, 1
    %s14 = ssub.s32 %s8, 2
    %s21 = sadd.s32 1, %s16
    %p22 = scmp.ge.s32.totalorder %s21, 1
    %s23 = scalar_select %p22, 0, %s21
    %s24 = sadd.s32 1, %s15
    %s25 = scalar_select %p22, %s24, %s15
    %p26 = scmp.ge.s32.totalorder %s25, 2
    %s27 = scalar_select %p26, 0, %s25
    %s29 = sadd.s32 %s28, 1
    %p32 = scmp.eq.s32.totalorder %s8, 1
    %p33 = scmp.ne.s32.totalorder %s28, %s30
    %p34 = scmp.eq.s32.totalorder %s8, 0
    %p35 = por %p33, %p34
    %p36 = scmp.ne.s32.totalorder %s28, %s30
    %p37 = scmp.eq.s32.totalorder %s13, 1
    %p38 = por %p36, %p37
    %p39 = scmp.ne.s32.totalorder %s30, %s31
    %p40 = scmp.eq.s32.totalorder %s13, 0
    %p41 = por %p39, %p40
    %p42 = scmp.ne.s32.totalorder %s30, %s31
    %p43 = scmp.eq.s32.totalorder %s14, 1
    %p44 = por %p42, %p43
    %p46 = scmp.ne.s32.totalorder %s31, %s45
    %p47 = scmp.eq.s32.totalorder %s14, 0
    %p48 = por %p46, %p47
    %s49 = ssub.s32 %s15, %s27
    %s50 = ssub.s32 %s16, %s23
    %s51 = sor.u32 %s49, %s50
    %p52 = scmp.eq.s32.totalorder %s51, 0
    %s54 = sadd.s32 %s53, 1
    %s55 = scalar_select %p52, %s53, %s54
    %p58 = pneg %p52
    %p59 = scmp.eq.s32.totalorder %s8, 1
    %p60 = por %p58, %p59
    %p61 = scmp.ne.s32.totalorder %s53, %s56
    %p62 = scmp.eq.s32.totalorder %s8, 0
    %p63 = por %p61, %p62
    %p64 = scmp.ne.s32.totalorder %s53, %s56
    %p65 = scmp.eq.s32.totalorder %s13, 1
    %p66 = por %p64, %p65
    %p67 = scmp.ne.s32.totalorder %s56, %s57
    %p68 = scmp.eq.s32.totalorder %s13, 0
    %p69 = por %p67, %p68
    %p70 = scmp.ne.s32.totalorder %s56, %s57
    %p71 = scmp.eq.s32.totalorder %s14, 1
    %p72 = por %p70, %p71
    %p74 = scmp.ne.s32.totalorder %s57, %s73
    %p75 = scmp.eq.s32.totalorder %s14, 0
    %p76 = por %p74, %p75
    %s77 = ssub.s32 %s15, %s27
    %s78 = ssub.s32 %s16, %s23
    %s79 = sor.u32 %s77, %s78
    %p80 = scmp.eq.s32.totalorder %s79, 0
    %s82 = sadd.s32 %s81, 1
    %s83 = scalar_select %p80, %s81, %s82
    %p86 = pneg %p80
    %p87 = scmp.eq.s32.totalorder %s8, 1
    %p88 = por %p86, %p87
    %p89 = scmp.ne.s32.totalorder %s81, %s84
    %p90 = scmp.eq.s32.totalorder %s8, 0
    %p91 = por %p89, %p90
    %p92 = scmp.ne.s32.totalorder %s81, %s84
    %p93 = scmp.eq.s32.totalorder %s13, 1
    %p94 = por %p92, %p93
    %p95 = scmp.ne.s32.totalorder %s84, %s85
    %p96 = scmp.eq.s32.totalorder %s13, 0
    %p97 = por %p95, %p96
    %p98 = scmp.ne.s32.totalorder %s84, %s85
    %p99 = scmp.eq.s32.totalorder %s14, 1
    %p100 = por %p98, %p99
    %p102 = scmp.ne.s32.totalorder %s85, %s101
    %p103 = scmp.eq.s32.totalorder %s14, 0
    %p104 = por %p102, %p103
    %p105 = scmp.le.s32.totalorder 1, %s8
    %p106 = scmp.lt.s32.totalorder %s8, 3
    %p107 = pnand %p105, %p106
    %p108 = pneg %p107
    // Predicated region
    $region9: #{down_block.1} parent=5 // pred_check
      _
    $region10: #{down_block.1} parent=5 // pred_check_branch
      %110 = sbr.rel (%p107) target = $region12
    $region11: #{down_block.1} parent=5 // pred_region
      %s111 = ssub.s32 %s8, 1
      // Predicated region
      $region13: #{down_block.1} parent=11 // pred_check
        %p112 = pneg %p41
      $region14: #{down_block.1} parent=11 // pred_check_branch
        %114 = sbr.rel (%p112) target = $region16
      $region15: #{down_block.1} parent=11 // pred_region
        _
      $region16: #{down_block.1} parent=11 // pred_fallthru
        _
    $region12: #{down_block.1} parent=5 // pred_fallthru
      _
    %p115 = scmp.lt.s32.totalorder %s8, 2
    // Predicated region
    $region17: #{down_block.1} parent=5 // pred_check
      %p116 = pneg %p115
    $region18: #{down_block.1} parent=5 // pred_check_branch
      %118 = sbr.rel (%p116) target = $region20
    $region19: #{down_block.1} parent=5 // pred_region
      // Predicated region
      $region21: #{down_block.1} parent=19 // pred_check
        %p119 = pneg %p63
      $region22: #{down_block.1} parent=19 // pred_check_branch
        %121 = sbr.rel (%p119) target = $region24
      $region23: #{down_block.1} parent=19 // pred_region
        %p122 = scmp.lt.s32.totalorder %s15, 1
        %s123 = scalar_select %p122, %s15, 1
        %p124 = scmp.lt.s32.totalorder %s16, 0
        %s125 = scalar_select %p124, %s16, 0
        %s126 = smul.addr %s123, 4
        %s127 = sadd.s32 %s125, %s126
        %s128 = smul.addr %s127, 8
        %s129 = scalar_lea.vmem %s1, %s128
      $region24: #{down_block.1} parent=19 // pred_fallthru
        _
    $region20: #{down_block.1} parent=5 // pred_fallthru
      _
    %p130 = scmp.le.s32.totalorder 1, %s8
    %p131 = scmp.lt.s32.totalorder %s8, 3
    %p132 = pnand %p130, %p131
    %p133 = pneg %p132
    // Predicated region
    $region25: #{down_block.1} parent=5 // pred_check
      _
    $region26: #{down_block.1} parent=5 // pred_check_branch
      %135 = sbr.rel (%p132) target = $region28
    $region27: #{down_block.1} parent=5 // pred_region
      %s136 = ssub.s32 %s8, 1
      %p137 = pneg %p41
      %p138 = pneg %p38
      %p139 = scmp.lt.s32.totalorder %s17, 1
      %s140 = scalar_select %p139, %s17, 1
      %p141 = scmp.lt.s32.totalorder %s18, 0
      %s142 = scalar_select %p141, %s18, 0
      %s143 = smul.addr %s140, 4
      %s144 = sadd.s32 %s142, %s143
      %s145 = smul.addr %s144, 8
      %s146 = scalar_lea.vmem %s1, %s145
      %p147 = pneg %p69
      %p148 = pneg %p66
      %p149 = pneg %p97
      %p150 = pneg %p94
      %p151 = scmp.lt.s32.totalorder %s17, 1
      %s152 = scalar_select %p151, %s17, 1
      %p153 = scmp.lt.s32.totalorder %s18, 0
      %s154 = scalar_select %p153, %s18, 0
      %s155 = smul.addr %s152, 16
      %s156 = sadd.s32 %s154, %s155
      %s157 = smul.addr %s156, 8
      %s158 = scalar_lea.vmem %s2, %s157
      %p159 = scmp.lt.s32.totalorder %s17, 1
      %s160 = scalar_select %p159, %s17, 1
      %p161 = scmp.lt.s32.totalorder %s18, 0
      %s162 = scalar_select %p161, %s18, 0
      %s163 = smul.addr %s160, 4
      %s164 = sadd.s32 %s162, %s163
      %s165 = smul.addr %s164, 8
      %s166 = scalar_lea.vmem %s1, %s165
      %p167 = scmp.lt.s32.totalorder %s17, 1
      %s168 = scalar_select %p167, %s17, 1
      %p169 = scmp.lt.s32.totalorder %s18, 0
      %s170 = scalar_select %p169, %s18, 0
      %s171 = smul.addr %s168, 16
      %s172 = sadd.s32 %s170, %s171
      %s173 = smul.addr %s172, 8
      %s174 = scalar_lea.vmem %s2, %s173
      %v175 = vld [vmem:[%s166] sm:$0xff]
      %v176 = vld [vmem:[%s166 + $0x8] sm:$0xff]
      %v177 = vld [vmem:[%s166 + $0x10] sm:$0xff]
      %v178 = vld [vmem:[%s166 + $0x18] sm:$0xff]
      %v179 = vld [vmem:[%s0] sm:$0xff]
      %v180 = vld [vmem:[%s0 + $0x8] sm:$0xff]
      %vm181 = vcmask 130048
      %v183 = vsel %vm181, %v175, 0
      %v186 = vsel %vm181, %v176, 0
      %v189 = vsel %vm181, %v177, 0
      %v192 = vsel %vm181, %v178, 0
      %194 = vmatprep.subr.mxu0 0.0
      %v195 = vand.u32 %v179, 4294901760
      %196 = vmatpush1.msra.mxu0 %v195
      %197 = vmatprep.subr.mxu0 0.0
      %v198 = vand.u32 %v180, 4294901760
      %199 = vmatpush1.msra.mxu0 %v198
      %200 = vmatprep.subr.mxu0 0.0
      %201 = vmatpush1.msra.mxu0 0.0
      %202 = vmatprep.subr.mxu0 0.0
      %203 = vmatpush1.msra.mxu0 0.0
      %204 = vmatprep.subr.mxu0 0.0
      %205 = vmatpush1.msra.mxu0 0.0
      %206 = vmatprep.subr.mxu0 0.0
      %207 = vmatpush1.msra.mxu0 0.0
      %208 = vmatprep.subr.mxu0 0.0
      %209 = vmatpush1.msra.mxu0 0.0
      %210 = vmatprep.subr.mxu0 0.0
      %211 = vmatpush1.msra.mxu0 0.0
      %212 = vmatprep.subr.mxu0 0.0
      %213 = vmatpush1.msra.mxu0 0.0
      %214 = vmatprep.subr.mxu0 0.0
      %215 = vmatpush1.msra.mxu0 0.0
      %216 = vmatprep.subr.mxu0 0.0
      %217 = vmatpush1.msra.mxu0 0.0
      %218 = vmatprep.subr.mxu0 0.0
      %219 = vmatpush1.msra.mxu0 0.0
      %220 = vmatprep.subr.mxu0 0.0
      %221 = vmatpush1.msra.mxu0 0.0
      %222 = vmatprep.subr.mxu0 0.0
      %223 = vmatpush1.msra.mxu0 0.0
      %224 = vmatprep.subr.mxu0 0.0
      %225 = vmatpush1.msra.mxu0 0.0
      %226 = vmatprep.subr.mxu0 0.0
      %227 = vmatpush1.msra.mxu0 0.0
      %228 = vmatprep.subr.mxu0 0.0
      %229 = vmatpush1.msra.mxu0 0.0
      %230 = vmatprep.subr.mxu0 0.0
      %231 = vmatpush1.msra.mxu0 0.0
      %232 = vmatprep.subr.mxu0 0.0
      %233 = vmatpush1.msra.mxu0 0.0
      %234 = vmatprep.subr.mxu0 0.0
      %235 = vmatpush1.msra.mxu0 0.0
      %236 = vmatprep.subr.mxu0 0.0
      %237 = vmatpush1.msra.mxu0 0.0
      %238 = vmatprep.subr.mxu0 0.0
      %239 = vmatpush1.msra.mxu0 0.0
      %240 = vmatprep.subr.mxu0 0.0
      %241 = vmatpush1.msra.mxu0 0.0
      %242 = vmatprep.subr.mxu0 0.0
      %243 = vmatpush1.msra.mxu0 0.0
      %244 = vmatprep.subr.mxu0 0.0
      %245 = vmatpush1.msra.mxu0 0.0
      %246 = vmatprep.subr.mxu0 0.0
      %247 = vmatpush1.msra.mxu0 0.0
      %248 = vmatprep.subr.mxu0 0.0
      %249 = vmatpush1.msra.mxu0 0.0
      %250 = vmatprep.subr.mxu0 0.0
      %251 = vmatpush1.msra.mxu0 0.0
      %252 = vmatprep.subr.mxu0 0.0
      %253 = vmatpush1.msra.mxu0 0.0
      %254 = vmatprep.subr.mxu0 0.0
      %255 = vmatpush1.msra.mxu0 0.0
      %256 = vmatprep.subr.mxu0 0.0
      %257 = vmatpush1.msra.mxu0 0.0
      %258 = vmatprep.subr.mxu0 0.0
      %259 = vmatpush1.msra.mxu0 0.0
      %260 = vmatprep.mubr.f32.mxu0 0.0
      %v261 = vand.u32 %v183, 4294901760
      %v262 = vsub.f32 %v183, %v261
      %v263 = vand.u32 %v262, 4294901760
      %v264 = vsub.f32 %v262, %v263
      %v265 = vand.u32 %v264, 4294901760
      %266 = vmatmul.mubr.f32.gmra.mrb[0].mxu0 %v265
      %v267 = vpop.f32.mrb[0].mxu0
      %v268 = vadd.f32 0.0, %v267
      %v269 = vpop.f32.mrb[0].mxu0
      %270 = vmatprep.mubr.f32.mxu0 0.0
      %v271 = vand.u32 %v186, 4294901760
      %v272 = vsub.f32 %v186, %v271
      %v273 = vand.u32 %v272, 4294901760
      %v274 = vsub.f32 %v272, %v273
      %v275 = vand.u32 %v274, 4294901760
      %276 = vmatmul.mubr.f32.gmra.mrb[0].mxu0 %v275
      %v277 = vpop.f32.mrb[0].mxu0
      %v278 = vadd.f32 0.0, %v277
      %v279 = vpop.f32.mrb[0].mxu0
      %280 = vmatprep.mubr.f32.mxu0 0.0
      %v281 = vand.u32 %v189, 4294901760
      %v282 = vsub.f32 %v189, %v281
      %v283 = vand.u32 %v282, 4294901760
      %v284 = vsub.f32 %v282, %v283
      %v285 = vand.u32 %v284, 4294901760
      %286 = vmatmul.mubr.f32.gmra.mrb[0].mxu0 %v285
      %v287 = vpop.f32.mrb[0].mxu0
      %v288 = vadd.f32 0.0, %v287
      %v289 = vpop.f32.mrb[0].mxu0
      %290 = vmatprep.mubr.f32.mxu0 0.0
      %v291 = vand.u32 %v192, 4294901760
      %v292 = vsub.f32 %v192, %v291
      %v293 = vand.u32 %v292, 4294901760
      %v294 = vsub.f32 %v292, %v293
      %v295 = vand.u32 %v294, 4294901760
      %296 = vmatmul.mubr.f32.gmra.mrb[0].mxu0 %v295
      %v297 = vpop.f32.mrb[0].mxu0
      %v298 = vadd.f32 0.0, %v297
      %v299 = vpop.f32.mrb[0].mxu0
      %300 = vdwg.mxu0
      %301 = vmatprep.subr.mxu0 0.0
      %v302 = vand.u32 %v179, 4294901760
      %v303 = vsub.f32 %v179, %v302
      %v304 = vand.u32 %v303, 4294901760
      %v305 = vsub.f32 %v303, %v304
      %v306 = vand.u32 %v305, 4294901760
      %307 = vmatpush1.msra.mxu0 %v306
      %308 = vmatprep.subr.mxu0 0.0
      %v309 = vand.u32 %v180, 4294901760
      %v310 = vsub.f32 %v180, %v309
      %v311 = vand.u32 %v310, 4294901760
      %v312 = vsub.f32 %v310, %v311
      %v313 = vand.u32 %v312, 4294901760
      %314 = vmatpush1.msra.mxu0 %v313
      %315 = vmatprep.subr.mxu0 0.0
      %316 = vmatpush1.msra.mxu0 0.0
      %317 = vmatprep.subr.mxu0 0.0
      %318 = vmatpush1.msra.mxu0 0.0
      %319 = vmatprep.subr.mxu0 0.0
      %320 = vmatpush1.msra.mxu0 0.0
      %321 = vmatprep.subr.mxu0 0.0
      %322 = vmatpush1.msra.mxu0 0.0
      %323 = vmatprep.subr.mxu0 0.0
      %324 = vmatpush1.msra.mxu0 0.0
      %325 = vmatprep.subr.mxu0 0.0
      %326 = vmatpush1.msra.mxu0 0.0
      %327 = vmatprep.subr.mxu0 0.0
      %328 = vmatpush1.msra.mxu0 0.0
      %329 = vmatprep.subr.mxu0 0.0
      %330 = vmatpush1.msra.mxu0 0.0
      %331 = vmatprep.subr.mxu0 0.0
      %332 = vmatpush1.msra.mxu0 0.0
      %333 = vmatprep.subr.mxu0 0.0
      %334 = vmatpush1.msra.mxu0 0.0
      %335 = vmatprep.subr.mxu0 0.0
      %336 = vmatpush1.msra.mxu0 0.0
      %337 = vmatprep.subr.mxu0 0.0
      %338 = vmatpush1.msra.mxu0 0.0
      %339 = vmatprep.subr.mxu0 0.0
      %340 = vmatpush1.msra.mxu0 0.0
      %341 = vmatprep.subr.mxu0 0.0
      %342 = vmatpush1.msra.mxu0 0.0
      %343 = vmatprep.subr.mxu0 0.0
      %344 = vmatpush1.msra.mxu0 0.0
      %345 = vmatprep.subr.mxu0 0.0
      %346 = vmatpush1.msra.mxu0 0.0
      %347 = vmatprep.subr.mxu0 0.0
      %348 = vmatpush1.msra.mxu0 0.0
      %349 = vmatprep.subr.mxu0 0.0
      %350 = vmatpush1.msra.mxu0 0.0
      %351 = vmatprep.subr.mxu0 0.0
      %352 = vmatpush1.msra.mxu0 0.0
      %353 = vmatprep.subr.mxu0 0.0
      %354 = vmatpush1.msra.mxu0 0.0
      %355 = vmatprep.subr.mxu0 0.0
      %356 = vmatpush1.msra.mxu0 0.0
      %357 = vmatprep.subr.mxu0 0.0
      %358 = vmatpush1.msra.mxu0 0.0
      %359 = vmatprep.subr.mxu0 0.0
      %360 = vmatpush1.msra.mxu0 0.0
      %361 = vmatprep.subr.mxu0 0.0
      %362 = vmatpush1.msra.mxu0 0.0
      %363 = vmatprep.subr.mxu0 0.0
      %364 = vmatpush1.msra.mxu0 0.0
      %365 = vmatprep.subr.mxu0 0.0
      %366 = vmatpush1.msra.mxu0 0.0
      %367 = vmatprep.subr.mxu0 0.0
      %368 = vmatpush1.msra.mxu0 0.0
      %369 = vmatprep.subr.mxu0 0.0
      %370 = vmatpush1.msra.mxu0 0.0
      %371 = vmatprep.subr.mxu0 0.0
      %372 = vmatpush1.msra.mxu0 0.0
      %373 = vmatprep.subr.mxu0 0.0
      %374 = vmatpush1.msra.mxu0 0.0
      %375 = vmatprep.mubr.f32.mxu0 0.0
      %v376 = vand.u32 %v183, 4294901760
      %377 = vmatmul.mubr.f32.gmra.mrb[0].mxu0 %v376
      %v378 = vpop.f32.mrb[0].mxu0
      %v379 = vadd.f32 %v268, %v378
      %v380 = vpop.f32.mrb[0].mxu0
      %381 = vmatprep.mubr.f32.mxu0 0.0
      %v382 = vand.u32 %v186, 4294901760
      %383 = vmatmul.mubr.f32.gmra.mrb[0].mxu0 %v382
      %v384 = vpop.f32.mrb[0].mxu0
      %v385 = vadd.f32 %v278, %v384
      %v386 = vpop.f32.mrb[0].mxu0
      %387 = vmatprep.mubr.f32.mxu0 0.0
      %v388 = vand.u32 %v189, 4294901760
      %389 = vmatmul.mubr.f32.gmra.mrb[0].mxu0 %v388
      %v390 = vpop.f32.mrb[0].mxu0
      %v391 = vadd.f32 %v288, %v390
      %v392 = vpop.f32.mrb[0].mxu0
      %393 = vmatprep.mubr.f32.mxu0 0.0
      %v394 = vand.u32 %v192, 4294901760
      %395 = vmatmul.mubr.f32.gmra.mrb[0].mxu0 %v394
      %v396 = vpop.f32.mrb[0].mxu0
      %v397 = vadd.f32 %v298, %v396
      %v398 = vpop.f32.mrb[0].mxu0
      %399 = vdwg.mxu0
      %400 = vmatprep.subr.mxu0 0.0
      %v401 = vand.u32 %v179, 4294901760
      %v402 = vsub.f32 %v179, %v401
      %403 = vmatpush1.msra.mxu0 %v402
      %404 = vmatprep.subr.mxu0 0.0
      %v405 = vand.u32 %v180, 4294901760
      %v406 = vsub.f32 %v180, %v405
      %407 = vmatpush1.msra.mxu0 %v406
      %408 = vmatprep.subr.mxu0 0.0
      %409 = vmatpush1.msra.mxu0 0.0
      %410 = vmatprep.subr.mxu0 0.0
      %411 = vmatpush1.msra.mxu0 0.0
      %412 = vmatprep.subr.mxu0 0.0
      %413 = vmatpush1.msra.mxu0 0.0
      %414 = vmatprep.subr.mxu0 0.0
      %415 = vmatpush1.msra.mxu0 0.0
      %416 = vmatprep.subr.mxu0 0.0
      %417 = vmatpush1.msra.mxu0 0.0
      %418 = vmatprep.subr.mxu0 0.0
      %419 = vmatpush1.msra.mxu0 0.0
      %420 = vmatprep.subr.mxu0 0.0
      %421 = vmatpush1.msra.mxu0 0.0
      %422 = vmatprep.subr.mxu0 0.0
      %423 = vmatpush1.msra.mxu0 0.0
      %424 = vmatprep.subr.mxu0 0.0
      %425 = vmatpush1.msra.mxu0 0.0
      %426 = vmatprep.subr.mxu0 0.0
      %427 = vmatpush1.msra.mxu0 0.0
      %428 = vmatprep.subr.mxu0 0.0
      %429 = vmatpush1.msra.mxu0 0.0
      %430 = vmatprep.subr.mxu0 0.0
      %431 = vmatpush1.msra.mxu0 0.0
      %432 = vmatprep.subr.mxu0 0.0
      %433 = vmatpush1.msra.mxu0 0.0
      %434 = vmatprep.subr.mxu0 0.0
      %435 = vmatpush1.msra.mxu0 0.0
      %436 = vmatprep.subr.mxu0 0.0
      %437 = vmatpush1.msra.mxu0 0.0
      %438 = vmatprep.subr.mxu0 0.0
      %439 = vmatpush1.msra.mxu0 0.0
      %440 = vmatprep.subr.mxu0 0.0
      %441 = vmatpush1.msra.mxu0 0.0
      %442 = vmatprep.subr.mxu0 0.0
      %443 = vmatpush1.msra.mxu0 0.0
      %444 = vmatprep.subr.mxu0 0.0
      %445 = vmatpush1.msra.mxu0 0.0
      %446 = vmatprep.subr.mxu0 0.0
      %447 = vmatpush1.msra.mxu0 0.0
      %448 = vmatprep.subr.mxu0 0.0
      %449 = vmatpush1.msra.mxu0 0.0
      %450 = vmatprep.subr.mxu0 0.0
      %451 = vmatpush1.msra.mxu0 0.0
      %452 = vmatprep.subr.mxu0 0.0
      %453 = vmatpush1.msra.mxu0 0.0
      %454 = vmatprep.subr.mxu0 0.0
      %455 = vmatpush1.msra.mxu0 0.0
      %456 = vmatprep.subr.mxu0 0.0
      %457 = vmatpush1.msra.mxu0 0.0
      %458 = vmatprep.subr.mxu0 0.0
      %459 = vmatpush1.msra.mxu0 0.0
      %460 = vmatprep.subr.mxu0 0.0
      %461 = vmatpush1.msra.mxu0 0.0
      %462 = vmatprep.subr.mxu0 0.0
      %463 = vmatpush1.msra.mxu0 0.0
      %464 = vmatprep.subr.mxu0 0.0
      %465 = vmatpush1.msra.mxu0 0.0
      %466 = vmatprep.subr.mxu0 0.0
      %467 = vmatpush1.msra.mxu0 0.0
      %468 = vmatprep.mubr.f32.mxu0 0.0
      %v469 = vand.u32 %v183, 4294901760
      %v470 = vsub.f32 %v183, %v469
      %471 = vmatmul.mubr.f32.gmra.mrb[0].mxu0 %v470
      %v472 = vpop.f32.mrb[0].mxu0
      %v473 = vadd.f32 %v379, %v472
      %v474 = vpop.f32.mrb[0].mxu0
      %475 = vmatprep.mubr.f32.mxu0 0.0
      %v476 = vand.u32 %v186, 4294901760
      %v477 = vsub.f32 %v186, %v476
      %478 = vmatmul.mubr.f32.gmra.mrb[0].mxu0 %v477
      %v479 = vpop.f32.mrb[0].mxu0
      %v480 = vadd.f32 %v385, %v479
      %v481 = vpop.f32.mrb[0].mxu0
      %482 = vmatprep.mubr.f32.mxu0 0.0
      %v483 = vand.u32 %v189, 4294901760
      %v484 = vsub.f32 %v189, %v483
      %485 = vmatmul.mubr.f32.gmra.mrb[0].mxu0 %v484
      %v486 = vpop.f32.mrb[0].mxu0
      %v487 = vadd.f32 %v391, %v486
      %v488 = vpop.f32.mrb[0].mxu0
      %489 = vmatprep.mubr.f32.mxu0 0.0
      %v490 = vand.u32 %v192, 4294901760
      %v491 = vsub.f32 %v192, %v490
      %492 = vmatmul.mubr.f32.gmra.mrb[0].mxu0 %v491
      %v493 = vpop.f32.mrb[0].mxu0
      %v494 = vadd.f32 %v397, %v493
      %v495 = vpop.f32.mrb[0].mxu0
      %496 = vdwg.mxu0
      %497 = vmatprep.subr.mxu0 0.0
      %v498 = vand.u32 %v179, 4294901760
      %499 = vmatpush1.msra.mxu0 %v498
      %500 = vmatprep.subr.mxu0 0.0
      %v501 = vand.u32 %v180, 4294901760
      %502 = vmatpush1.msra.mxu0 %v501
      %503 = vmatprep.subr.mxu0 0.0
      %504 = vmatpush1.msra.mxu0 0.0
      %505 = vmatprep.subr.mxu0 0.0
      %506 = vmatpush1.msra.mxu0 0.0
      %507 = vmatprep.subr.mxu0 0.0
      %508 = vmatpush1.msra.mxu0 0.0
      %509 = vmatprep.subr.mxu0 0.0
      %510 = vmatpush1.msra.mxu0 0.0
      %511 = vmatprep.subr.mxu0 0.0
      %512 = vmatpush1.msra.mxu0 0.0
      %513 = vmatprep.subr.mxu0 0.0
      %514 = vmatpush1.msra.mxu0 0.0
      %515 = vmatprep.subr.mxu0 0.0
      %516 = vmatpush1.msra.mxu0 0.0
      %517 = vmatprep.subr.mxu0 0.0
      %518 = vmatpush1.msra.mxu0 0.0
      %519 = vmatprep.subr.mxu0 0.0
      %520 = vmatpush1.msra.mxu0 0.0
      %521 = vmatprep.subr.mxu0 0.0
      %522 = vmatpush1.msra.mxu0 0.0
      %523 = vmatprep.subr.mxu0 0.0
      %524 = vmatpush1.msra.mxu0 0.0
      %525 = vmatprep.subr.mxu0 0.0
      %526 = vmatpush1.msra.mxu0 0.0
      %527 = vmatprep.subr.mxu0 0.0
      %528 = vmatpush1.msra.mxu0 0.0
      %529 = vmatprep.subr.mxu0 0.0
      %530 = vmatpush1.msra.mxu0 0.0
      %531 = vmatprep.subr.mxu0 0.0
      %532 = vmatpush1.msra.mxu0 0.0
      %533 = vmatprep.subr.mxu0 0.0
      %534 = vmatpush1.msra.mxu0 0.0
      %535 = vmatprep.subr.mxu0 0.0
      %536 = vmatpush1.msra.mxu0 0.0
      %537 = vmatprep.subr.mxu0 0.0
      %538 = vmatpush1.msra.mxu0 0.0
      %539 = vmatprep.subr.mxu0 0.0
      %540 = vmatpush1.msra.mxu0 0.0
      %541 = vmatprep.subr.mxu0 0.0
      %542 = vmatpush1.msra.mxu0 0.0
      %543 = vmatprep.subr.mxu0 0.0
      %544 = vmatpush1.msra.mxu0 0.0
      %545 = vmatprep.subr.mxu0 0.0
      %546 = vmatpush1.msra.mxu0 0.0
      %547 = vmatprep.subr.mxu0 0.0
      %548 = vmatpush1.msra.mxu0 0.0
      %549 = vmatprep.subr.mxu0 0.0
      %550 = vmatpush1.msra.mxu0 0.0
      %551 = vmatprep.subr.mxu0 0.0
      %552 = vmatpush1.msra.mxu0 0.0
      %553 = vmatprep.subr.mxu0 0.0
      %554 = vmatpush1.msra.mxu0 0.0
      %555 = vmatprep.subr.mxu0 0.0
      %556 = vmatpush1.msra.mxu0 0.0
      %557 = vmatprep.subr.mxu0 0.0
      %558 = vmatpush1.msra.mxu0 0.0
      %559 = vmatprep.subr.mxu0 0.0
      %560 = vmatpush1.msra.mxu0 0.0
      %561 = vmatprep.subr.mxu0 0.0
      %562 = vmatpush1.msra.mxu0 0.0
      %563 = vmatprep.mubr.f32.mxu0 0.0
      %v564 = vand.u32 %v183, 4294901760
      %v565 = vsub.f32 %v183, %v564
      %v566 = vand.u32 %v565, 4294901760
      %567 = vmatmul.mubr.f32.gmra.mrb[0].mxu0 %v566
      %v568 = vpop.f32.mrb[0].mxu0
      %v569 = vadd.f32 %v473, %v568
      %v570 = vpop.f32.mrb[0].mxu0
      %571 = vmatprep.mubr.f32.mxu0 0.0
      %v572 = vand.u32 %v186, 4294901760
      %v573 = vsub.f32 %v186, %v572
      %v574 = vand.u32 %v573, 4294901760
      %575 = vmatmul.mubr.f32.gmra.mrb[0].mxu0 %v574
      %v576 = vpop.f32.mrb[0].mxu0
      %v577 = vadd.f32 %v480, %v576
      %v578 = vpop.f32.mrb[0].mxu0
      %579 = vmatprep.mubr.f32.mxu0 0.0
      %v580 = vand.u32 %v189, 4294901760
      %v581 = vsub.f32 %v189, %v580
      %v582 = vand.u32 %v581, 4294901760
      %583 = vmatmul.mubr.f32.gmra.mrb[0].mxu0 %v582
      %v584 = vpop.f32.mrb[0].mxu0
      %v585 = vadd.f32 %v487, %v584
      %v586 = vpop.f32.mrb[0].mxu0
      %587 = vmatprep.mubr.f32.mxu0 0.0
      %v588 = vand.u32 %v192, 4294901760
      %v589 = vsub.f32 %v192, %v588
      %v590 = vand.u32 %v589, 4294901760
      %591 = vmatmul.mubr.f32.gmra.mrb[0].mxu0 %v590
      %v592 = vpop.f32.mrb[0].mxu0
      %v593 = vadd.f32 %v494, %v592
      %v594 = vpop.f32.mrb[0].mxu0
      %595 = vdwg.mxu0
      %596 = vmatprep.subr.mxu0 0.0
      %v597 = vand.u32 %v179, 4294901760
      %v598 = vsub.f32 %v179, %v597
      %v599 = vand.u32 %v598, 4294901760
      %600 = vmatpush1.msra.mxu0 %v599
      %601 = vmatprep.subr.mxu0 0.0
      %v602 = vand.u32 %v180, 4294901760
      %v603 = vsub.f32 %v180, %v602
      %v604 = vand.u32 %v603, 4294901760
      %605 = vmatpush1.msra.mxu0 %v604
      %606 = vmatprep.subr.mxu0 0.0
      %607 = vmatpush1.msra.mxu0 0.0
      %608 = vmatprep.subr.mxu0 0.0
      %609 = vmatpush1.msra.mxu0 0.0
      %610 = vmatprep.subr.mxu0 0.0
      %611 = vmatpush1.msra.mxu0 0.0
      %612 = vmatprep.subr.mxu0 0.0
      %613 = vmatpush1.msra.mxu0 0.0
      %614 = vmatprep.subr.mxu0 0.0
      %615 = vmatpush1.msra.mxu0 0.0
      %616 = vmatprep.subr.mxu0 0.0
      %617 = vmatpush1.msra.mxu0 0.0
      %618 = vmatprep.subr.mxu0 0.0
      %619 = vmatpush1.msra.mxu0 0.0
      %620 = vmatprep.subr.mxu0 0.0
      %621 = vmatpush1.msra.mxu0 0.0
      %622 = vmatprep.subr.mxu0 0.0
      %623 = vmatpush1.msra.mxu0 0.0
      %624 = vmatprep.subr.mxu0 0.0
      %625 = vmatpush1.msra.mxu0 0.0
      %626 = vmatprep.subr.mxu0 0.0
      %627 = vmatpush1.msra.mxu0 0.0
      %628 = vmatprep.subr.mxu0 0.0
      %629 = vmatpush1.msra.mxu0 0.0
      %630 = vmatprep.subr.mxu0 0.0
      %631 = vmatpush1.msra.mxu0 0.0
      %632 = vmatprep.subr.mxu0 0.0
      %633 = vmatpush1.msra.mxu0 0.0
      %634 = vmatprep.subr.mxu0 0.0
      %635 = vmatpush1.msra.mxu0 0.0
      %636 = vmatprep.subr.mxu0 0.0
      %637 = vmatpush1.msra.mxu0 0.0
      %638 = vmatprep.subr.mxu0 0.0
      %639 = vmatpush1.msra.mxu0 0.0
      %640 = vmatprep.subr.mxu0 0.0
      %641 = vmatpush1.msra.mxu0 0.0
      %642 = vmatprep.subr.mxu0 0.0
      %643 = vmatpush1.msra.mxu0 0.0
      %644 = vmatprep.subr.mxu0 0.0
      %645 = vmatpush1.msra.mxu0 0.0
      %646 = vmatprep.subr.mxu0 0.0
      %647 = vmatpush1.msra.mxu0 0.0
      %648 = vmatprep.subr.mxu0 0.0
      %649 = vmatpush1.msra.mxu0 0.0
      %650 = vmatprep.subr.mxu0 0.0
      %651 = vmatpush1.msra.mxu0 0.0
      %652 = vmatprep.subr.mxu0 0.0
      %653 = vmatpush1.msra.mxu0 0.0
      %654 = vmatprep.subr.mxu0 0.0
      %655 = vmatpush1.msra.mxu0 0.0
      %656 = vmatprep.subr.mxu0 0.0
      %657 = vmatpush1.msra.mxu0 0.0
      %658 = vmatprep.subr.mxu0 0.0
      %659 = vmatpush1.msra.mxu0 0.0
      %660 = vmatprep.subr.mxu0 0.0
      %661 = vmatpush1.msra.mxu0 0.0
      %662 = vmatprep.subr.mxu0 0.0
      %663 = vmatpush1.msra.mxu0 0.0
      %664 = vmatprep.subr.mxu0 0.0
      %665 = vmatpush1.msra.mxu0 0.0
      %666 = vmatprep.mubr.f32.mxu0 0.0
      %v667 = vand.u32 %v183, 4294901760
      %668 = vmatmul.mubr.f32.gmra.mrb[0].mxu0 %v667
      %v669 = vpop.f32.mrb[0].mxu0
      %v670 = vadd.f32 %v569, %v669
      %v671 = vpop.f32.mrb[0].mxu0
      %672 = vmatprep.mubr.f32.mxu0 0.0
      %v673 = vand.u32 %v186, 4294901760
      %674 = vmatmul.mubr.f32.gmra.mrb[0].mxu0 %v673
      %v675 = vpop.f32.mrb[0].mxu0
      %v676 = vadd.f32 %v577, %v675
      %v677 = vpop.f32.mrb[0].mxu0
      %678 = vmatprep.mubr.f32.mxu0 0.0
      %v679 = vand.u32 %v189, 4294901760
      %680 = vmatmul.mubr.f32.gmra.mrb[0].mxu0 %v679
      %v681 = vpop.f32.mrb[0].mxu0
      %v682 = vadd.f32 %v585, %v681
      %v683 = vpop.f32.mrb[0].mxu0
      %684 = vmatprep.mubr.f32.mxu0 0.0
      %v685 = vand.u32 %v192, 4294901760
      %686 = vmatmul.mubr.f32.gmra.mrb[0].mxu0 %v685
      %v687 = vpop.f32.mrb[0].mxu0
      %v688 = vadd.f32 %v593, %v687
      %v689 = vpop.f32.mrb[0].mxu0
      %690 = vdwg.mxu0
      %691 = vmatprep.subr.mxu0 0.0
      %v692 = vand.u32 %v179, 4294901760
      %693 = vmatpush1.msra.mxu0 %v692
      %694 = vmatprep.subr.mxu0 0.0
      %v695 = vand.u32 %v180, 4294901760
      %696 = vmatpush1.msra.mxu0 %v695
      %697 = vmatprep.subr.mxu0 0.0
      %698 = vmatpush1.msra.mxu0 0.0
      %699 = vmatprep.subr.mxu0 0.0
      %700 = vmatpush1.msra.mxu0 0.0
      %701 = vmatprep.subr.mxu0 0.0
      %702 = vmatpush1.msra.mxu0 0.0
      %703 = vmatprep.subr.mxu0 0.0
      %704 = vmatpush1.msra.mxu0 0.0
      %705 = vmatprep.subr.mxu0 0.0
      %706 = vmatpush1.msra.mxu0 0.0
      %707 = vmatprep.subr.mxu0 0.0
      %708 = vmatpush1.msra.mxu0 0.0
      %709 = vmatprep.subr.mxu0 0.0
      %710 = vmatpush1.msra.mxu0 0.0
      %711 = vmatprep.subr.mxu0 0.0
      %712 = vmatpush1.msra.mxu0 0.0
      %713 = vmatprep.subr.mxu0 0.0
      %714 = vmatpush1.msra.mxu0 0.0
      %715 = vmatprep.subr.mxu0 0.0
      %716 = vmatpush1.msra.mxu0 0.0
      %717 = vmatprep.subr.mxu0 0.0
      %718 = vmatpush1.msra.mxu0 0.0
      %719 = vmatprep.subr.mxu0 0.0
      %720 = vmatpush1.msra.mxu0 0.0
      %721 = vmatprep.subr.mxu0 0.0
      %722 = vmatpush1.msra.mxu0 0.0
      %723 = vmatprep.subr.mxu0 0.0
      %724 = vmatpush1.msra.mxu0 0.0
      %725 = vmatprep.subr.mxu0 0.0
      %726 = vmatpush1.msra.mxu0 0.0
      %727 = vmatprep.subr.mxu0 0.0
      %728 = vmatpush1.msra.mxu0 0.0
      %729 = vmatprep.subr.mxu0 0.0
      %730 = vmatpush1.msra.mxu0 0.0
      %731 = vmatprep.subr.mxu0 0.0
      %732 = vmatpush1.msra.mxu0 0.0
      %733 = vmatprep.subr.mxu0 0.0
      %734 = vmatpush1.msra.mxu0 0.0
      %735 = vmatprep.subr.mxu0 0.0
      %736 = vmatpush1.msra.mxu0 0.0
      %737 = vmatprep.subr.mxu0 0.0
      %738 = vmatpush1.msra.mxu0 0.0
      %739 = vmatprep.subr.mxu0 0.0
      %740 = vmatpush1.msra.mxu0 0.0
      %741 = vmatprep.subr.mxu0 0.0
      %742 = vmatpush1.msra.mxu0 0.0
      %743 = vmatprep.subr.mxu0 0.0
      %744 = vmatpush1.msra.mxu0 0.0
      %745 = vmatprep.subr.mxu0 0.0
      %746 = vmatpush1.msra.mxu0 0.0
      %747 = vmatprep.subr.mxu0 0.0
      %748 = vmatpush1.msra.mxu0 0.0
      %749 = vmatprep.subr.mxu0 0.0
      %750 = vmatpush1.msra.mxu0 0.0
      %751 = vmatprep.subr.mxu0 0.0
      %752 = vmatpush1.msra.mxu0 0.0
      %753 = vmatprep.subr.mxu0 0.0
      %754 = vmatpush1.msra.mxu0 0.0
      %755 = vmatprep.subr.mxu0 0.0
      %756 = vmatpush1.msra.mxu0 0.0
      %757 = vmatprep.mubr.f32.mxu0 0.0
      %v758 = vand.u32 %v183, 4294901760
      %759 = vmatmul.mubr.f32.gmra.mrb[0].mxu0 %v758
      %v760 = vpop.f32.mrb[0].mxu0
      %v761 = vadd.f32 %v670, %v760
      %v762 = vpop.f32.mrb[0].mxu0
      %763 = vmatprep.mubr.f32.mxu0 0.0
      %v764 = vand.u32 %v186, 4294901760
      %765 = vmatmul.mubr.f32.gmra.mrb[0].mxu0 %v764
      %v766 = vpop.f32.mrb[0].mxu0
      %v767 = vadd.f32 %v676, %v766
      %v768 = vpop.f32.mrb[0].mxu0
      %769 = vmatprep.mubr.f32.mxu0 0.0
      %v770 = vand.u32 %v189, 4294901760
      %771 = vmatmul.mubr.f32.gmra.mrb[0].mxu0 %v770
      %v772 = vpop.f32.mrb[0].mxu0
      %v773 = vadd.f32 %v682, %v772
      %v774 = vpop.f32.mrb[0].mxu0
      %775 = vmatprep.mubr.f32.mxu0 0.0
      %v776 = vand.u32 %v192, 4294901760
      %777 = vmatmul.mubr.f32.gmra.mrb[0].mxu0 %v776
      %v778 = vpop.f32.mrb[0].mxu0
      %v779 = vadd.f32 %v688, %v778
      %v780 = vpop.f32.mrb[0].mxu0
      %781 = vdwg.mxu0
      %vm782 = vcmask 64512
      %783 = vst.msk [vmem:[%s174] sm:$0xff] %vm782, %v761
      %784 = vst.msk [vmem:[%s174 + $0x8] sm:$0xff] %vm782, %v767
      %785 = vst.msk [vmem:[%s174 + $0x10] sm:$0xff] %vm782, %v773
      %786 = vst.msk [vmem:[%s174 + $0x18] sm:$0xff] %vm782, %v779
      %s787 = scalar_lea.vmem %s0, 16
      %v788 = vld [vmem:[%s787] sm:$0xff]
      %v789 = vld [vmem:[%s787 + $0x8] sm:$0xff]
      %790 = vmatprep.subr.mxu0 0.0
      %v791 = vand.u32 %v788, 4294901760
      %792 = vmatpush1.msra.mxu0 %v791
      %793 = vmatprep.subr.mxu0 0.0
      %v794 = vand.u32 %v789, 4294901760
      %795 = vmatpush1.msra.mxu0 %v794
      %796 = vmatprep.subr.mxu0 0.0
      %797 = vmatpush1.msra.mxu0 0.0
      %798 = vmatprep.subr.mxu0 0.0
      %799 = vmatpush1.msra.mxu0 0.0
      %800 = vmatprep.subr.mxu0 0.0
      %801 = vmatpush1.msra.mxu0 0.0
      %802 = vmatprep.subr.mxu0 0.0
      %803 = vmatpush1.msra.mxu0 0.0
      %804 = vmatprep.subr.mxu0 0.0
      %805 = vmatpush1.msra.mxu0 0.0
      %806 = vmatprep.subr.mxu0 0.0
      %807 = vmatpush1.msra.mxu0 0.0
      %808 = vmatprep.subr.mxu0 0.0
      %809 = vmatpush1.msra.mxu0 0.0
      %810 = vmatprep.subr.mxu0 0.0
      %811 = vmatpush1.msra.mxu0 0.0
      %812 = vmatprep.subr.mxu0 0.0
      %813 = vmatpush1.msra.mxu0 0.0
      %814 = vmatprep.subr.mxu0 0.0
      %815 = vmatpush1.msra.mxu0 0.0
      %816 = vmatprep.subr.mxu0 0.0
      %817 = vmatpush1.msra.mxu0 0.0
      %818 = vmatprep.subr.mxu0 0.0
      %819 = vmatpush1.msra.mxu0 0.0
      %820 = vmatprep.subr.mxu0 0.0
      %821 = vmatpush1.msra.mxu0 0.0
      %822 = vmatprep.subr.mxu0 0.0
      %823 = vmatpush1.msra.mxu0 0.0
      %824 = vmatprep.subr.mxu0 0.0
      %825 = vmatpush1.msra.mxu0 0.0
      %826 = vmatprep.subr.mxu0 0.0
      %827 = vmatpush1.msra.mxu0 0.0
      %828 = vmatprep.subr.mxu0 0.0
      %829 = vmatpush1.msra.mxu0 0.0
      %830 = vmatprep.subr.mxu0 0.0
      %831 = vmatpush1.msra.mxu0 0.0
      %832 = vmatprep.subr.mxu0 0.0
      %833 = vmatpush1.msra.mxu0 0.0
      %834 = vmatprep.subr.mxu0 0.0
      %835 = vmatpush1.msra.mxu0 0.0
      %836 = vmatprep.subr.mxu0 0.0
      %837 = vmatpush1.msra.mxu0 0.0
      %838 = vmatprep.subr.mxu0 0.0
      %839 = vmatpush1.msra.mxu0 0.0
      %840 = vmatprep.subr.mxu0 0.0
      %841 = vmatpush1.msra.mxu0 0.0
      %842 = vmatprep.subr.mxu0 0.0
      %843 = vmatpush1.msra.mxu0 0.0
      %844 = vmatprep.subr.mxu0 0.0
      %845 = vmatpush1.msra.mxu0 0.0
      %846 = vmatprep.subr.mxu0 0.0
      %847 = vmatpush1.msra.mxu0 0.0
      %848 = vmatprep.subr.mxu0 0.0
      %849 = vmatpush1.msra.mxu0 0.0
      %850 = vmatprep.subr.mxu0 0.0
      %851 = vmatpush1.msra.mxu0 0.0
      %852 = vmatprep.subr.mxu0 0.0
      %853 = vmatpush1.msra.mxu0 0.0
      %854 = vmatprep.subr.mxu0 0.0
      %855 = vmatpush1.msra.mxu0 0.0
      %856 = vmatprep.mubr.f32.mxu0 0.0
      %v857 = vand.u32 %v183, 4294901760
      %v858 = vsub.f32 %v183, %v857
      %v859 = vand.u32 %v858, 4294901760
      %v860 = vsub.f32 %v858, %v859
      %v861 = vand.u32 %v860, 4294901760
      %862 = vmatmul.mubr.f32.gmra.mrb[0].mxu0 %v861
      %v863 = vpop.f32.mrb[0].mxu0
      %v864 = vadd.f32 0.0, %v863
      %v865 = vpop.f32.mrb[0].mxu0
      %866 = vmatprep.mubr.f32.mxu0 0.0
      %v867 = vand.u32 %v186, 4294901760
      %v868 = vsub.f32 %v186, %v867
      %v869 = vand.u32 %v868, 4294901760
      %v870 = vsub.f32 %v868, %v869
      %v871 = vand.u32 %v870, 4294901760
      %872 = vmatmul.mubr.f32.gmra.mrb[0].mxu0 %v871
      %v873 = vpop.f32.mrb[0].mxu0
      %v874 = vadd.f32 0.0, %v873
      %v875 = vpop.f32.mrb[0].mxu0
      %876 = vmatprep.mubr.f32.mxu0 0.0
      %v877 = vand.u32 %v189, 4294901760
      %v878 = vsub.f32 %v189, %v877
      %v879 = vand.u32 %v878, 4294901760
      %v880 = vsub.f32 %v878, %v879
      %v881 = vand.u32 %v880, 4294901760
      %882 = vmatmul.mubr.f32.gmra.mrb[0].mxu0 %v881
      %v883 = vpop.f32.mrb[0].mxu0
      %v884 = vadd.f32 0.0, %v883
      %v885 = vpop.f32.mrb[0].mxu0
      %886 = vmatprep.mubr.f32.mxu0 0.0
      %v887 = vand.u32 %v192, 4294901760
      %v888 = vsub.f32 %v192, %v887
      %v889 = vand.u32 %v888, 4294901760
      %v890 = vsub.f32 %v888, %v889
      %v891 = vand.u32 %v890, 4294901760
      %892 = vmatmul.mubr.f32.gmra.mrb[0].mxu0 %v891
      %v893 = vpop.f32.mrb[0].mxu0
      %v894 = vadd.f32 0.0, %v893
      %v895 = vpop.f32.mrb[0].mxu0
      %896 = vdwg.mxu0
      %897 = vmatprep.subr.mxu0 0.0
      %v898 = vand.u32 %v788, 4294901760
      %v899 = vsub.f32 %v788, %v898
      %v900 = vand.u32 %v899, 4294901760
      %v901 = vsub.f32 %v899, %v900
      %v902 = vand.u32 %v901, 4294901760
      %903 = vmatpush1.msra.mxu0 %v902
      %904 = vmatprep.subr.mxu0 0.0
      %v905 = vand.u32 %v789, 4294901760
      %v906 = vsub.f32 %v789, %v905
      %v907 = vand.u32 %v906, 4294901760
      %v908 = vsub.f32 %v906, %v907
      %v909 = vand.u32 %v908, 4294901760
      %910 = vmatpush1.msra.mxu0 %v909
      %911 = vmatprep.subr.mxu0 0.0
      %912 = vmatpush1.msra.mxu0 0.0
      %913 = vmatprep.subr.mxu0 0.0
      %914 = vmatpush1.msra.mxu0 0.0
      %915 = vmatprep.subr.mxu0 0.0
      %916 = vmatpush1.msra.mxu0 0.0
      %917 = vmatprep.subr.mxu0 0.0
      %918 = vmatpush1.msra.mxu0 0.0
      %919 = vmatprep.subr.mxu0 0.0
      %920 = vmatpush1.msra.mxu0 0.0
      %921 = vmatprep.subr.mxu0 0.0
      %922 = vmatpush1.msra.mxu0 0.0
      %923 = vmatprep.subr.mxu0 0.0
      %924 = vmatpush1.msra.mxu0 0.0
      %925 = vmatprep.subr.mxu0 0.0
      %926 = vmatpush1.msra.mxu0 0.0
      %927 = vmatprep.subr.mxu0 0.0
      %928 = vmatpush1.msra.mxu0 0.0
      %929 = vmatprep.subr.mxu0 0.0
      %930 = vmatpush1.msra.mxu0 0.0
      %931 = vmatprep.subr.mxu0 0.0
      %932 = vmatpush1.msra.mxu0 0.0
      %933 = vmatprep.subr.mxu0 0.0
      %934 = vmatpush1.msra.mxu0 0.0
      %935 = vmatprep.subr.mxu0 0.0
      %936 = vmatpush1.msra.mxu0 0.0
      %937 = vmatprep.subr.mxu0 0.0
      %938 = vmatpush1.msra.mxu0 0.0
      %939 = vmatprep.subr.mxu0 0.0
      %940 = vmatpush1.msra.mxu0 0.0
      %941 = vmatprep.subr.mxu0 0.0
      %942 = vmatpush1.msra.mxu0 0.0
      %943 = vmatprep.subr.mxu0 0.0
      %944 = vmatpush1.msra.mxu0 0.0
      %945 = vmatprep.subr.mxu0 0.0
      %946 = vmatpush1.msra.mxu0 0.0
      %947 = vmatprep.subr.mxu0 0.0
      %948 = vmatpush1.msra.mxu0 0.0
      %949 = vmatprep.subr.mxu0 0.0
      %950 = vmatpush1.msra.mxu0 0.0
      %951 = vmatprep.subr.mxu0 0.0
      %952 = vmatpush1.msra.mxu0 0.0
      %953 = vmatprep.subr.mxu0 0.0
      %954 = vmatpush1.msra.mxu0 0.0
      %955 = vmatprep.subr.mxu0 0.0
      %956 = vmatpush1.msra.mxu0 0.0
      %957 = vmatprep.subr.mxu0 0.0
      %958 = vmatpush1.msra.mxu0 0.0
      %959 = vmatprep.subr.mxu0 0.0
      %960 = vmatpush1.msra.mxu0 0.0
      %961 = vmatprep.subr.mxu0 0.0
      %962 = vmatpush1.msra.mxu0 0.0
      %963 = vmatprep.subr.mxu0 0.0
      %964 = vmatpush1.msra.mxu0 0.0
      %965 = vmatprep.subr.mxu0 0.0
      %966 = vmatpush1.msra.mxu0 0.0
      %967 = vmatprep.subr.mxu0 0.0
      %968 = vmatpush1.msra.mxu0 0.0
      %969 = vmatprep.subr.mxu0 0.0
      %970 = vmatpush1.msra.mxu0 0.0
      %971 = vmatprep.mubr.f32.mxu0 0.0
      %v972 = vand.u32 %v183, 4294901760
      %973 = vmatmul.mubr.f32.gmra.mrb[0].mxu0 %v972
      %v974 = vpop.f32.mrb[0].mxu0
      %v975 = vadd.f32 %v864, %v974
      %v976 = vpop.f32.mrb[0].mxu0
      %977 = vmatprep.mubr.f32.mxu0 0.0
      %v978 = vand.u32 %v186, 4294901760
      %979 = vmatmul.mubr.f32.gmra.mrb[0].mxu0 %v978
      %v980 = vpop.f32.mrb[0].mxu0
      %v981 = vadd.f32 %v874, %v980
      %v982 = vpop.f32.mrb[0].mxu0
      %983 = vmatprep.mubr.f32.mxu0 0.0
      %v984 = vand.u32 %v189, 4294901760
      %985 = vmatmul.mubr.f32.gmra.mrb[0].mxu0 %v984
      %v986 = vpop.f32.mrb[0].mxu0
      %v987 = vadd.f32 %v884, %v986
      %v988 = vpop.f32.mrb[0].mxu0
      %989 = vmatprep.mubr.f32.mxu0 0.0
      %v990 = vand.u32 %v192, 4294901760
      %991 = vmatmul.mubr.f32.gmra.mrb[0].mxu0 %v990
      %v992 = vpop.f32.mrb[0].mxu0
      %v993 = vadd.f32 %v894, %v992
      %v994 = vpop.f32.mrb[0].mxu0
      %995 = vdwg.mxu0
      %996 = vmatprep.subr.mxu0 0.0
      %v997 = vand.u32 %v788, 4294901760
      %v998 = vsub.f32 %v788, %v997
      %999 = vmatpush1.msra.mxu0 %v998
      %1000 = vmatprep.subr.mxu0 0.0
      %v1001 = vand.u32 %v789, 4294901760
      %v1002 = vsub.f32 %v789, %v1001
      %1003 = vmatpush1.msra.mxu0 %v1002
      %1004 = vmatprep.subr.mxu0 0.0
      %1005 = vmatpush1.msra.mxu0 0.0
      %1006 = vmatprep.subr.mxu0 0.0
      %1007 = vmatpush1.msra.mxu0 0.0
      %1008 = vmatprep.subr.mxu0 0.0
      %1009 = vmatpush1.msra.mxu0 0.0
      %1010 = vmatprep.subr.mxu0 0.0
      %1011 = vmatpush1.msra.mxu0 0.0
      %1012 = vmatprep.subr.mxu0 0.0
      %1013 = vmatpush1.msra.mxu0 0.0
      %1014 = vmatprep.subr.mxu0 0.0
      %1015 = vmatpush1.msra.mxu0 0.0
      %1016 = vmatprep.subr.mxu0 0.0
      %1017 = vmatpush1.msra.mxu0 0.0
      %1018 = vmatprep.subr.mxu0 0.0
      %1019 = vmatpush1.msra.mxu0 0.0
      %1020 = vmatprep.subr.mxu0 0.0
      %1021 = vmatpush1.msra.mxu0 0.0
      %1022 = vmatprep.subr.mxu0 0.0
      %1023 = vmatpush1.msra.mxu0 0.0
      %1024 = vmatprep.subr.mxu0 0.0
      %1025 = vmatpush1.msra.mxu0 0.0
      %1026 = vmatprep.subr.mxu0 0.0
      %1027 = vmatpush1.msra.mxu0 0.0
      %1028 = vmatprep.subr.mxu0 0.0
      %1029 = vmatpush1.msra.mxu0 0.0
      %1030 = vmatprep.subr.mxu0 0.0
      %1031 = vmatpush1.msra.mxu0 0.0
      %1032 = vmatprep.subr.mxu0 0.0
      %1033 = vmatpush1.msra.mxu0 0.0
      %1034 = vmatprep.subr.mxu0 0.0
      %1035 = vmatpush1.msra.mxu0 0.0
      %1036 = vmatprep.subr.mxu0 0.0
      %1037 = vmatpush1.msra.mxu0 0.0
      %1038 = vmatprep.subr.mxu0 0.0
      %1039 = vmatpush1.msra.mxu0 0.0
      %1040 = vmatprep.subr.mxu0 0.0
      %1041 = vmatpush1.msra.mxu0 0.0
      %1042 = vmatprep.subr.mxu0 0.0
      %1043 = vmatpush1.msra.mxu0 0.0
      %1044 = vmatprep.subr.mxu0 0.0
      %1045 = vmatpush1.msra.mxu0 0.0
      %1046 = vmatprep.subr.mxu0 0.0
      %1047 = vmatpush1.msra.mxu0 0.0
      %1048 = vmatprep.subr.mxu0 0.0
      %1049 = vmatpush1.msra.mxu0 0.0
      %1050 = vmatprep.subr.mxu0 0.0
      %1051 = vmatpush1.msra.mxu0 0.0
      %1052 = vmatprep.subr.mxu0 0.0
      %1053 = vmatpush1.msra.mxu0 0.0
      %1054 = vmatprep.subr.mxu0 0.0
      %1055 = vmatpush1.msra.mxu0 0.0
      %1056 = vmatprep.subr.mxu0 0.0
      %1057 = vmatpush1.msra.mxu0 0.0
      %1058 = vmatprep.subr.mxu0 0.0
      %1059 = vmatpush1.msra.mxu0 0.0
      %1060 = vmatprep.subr.mxu0 0.0
      %1061 = vmatpush1.msra.mxu0 0.0
      %1062 = vmatprep.subr.mxu0 0.0
      %1063 = vmatpush1.msra.mxu0 0.0
      %1064 = vmatprep.mubr.f32.mxu0 0.0
      %v1065 = vand.u32 %v183, 4294901760
      %v1066 = vsub.f32 %v183, %v1065
      %1067 = vmatmul.mubr.f32.gmra.mrb[0].mxu0 %v1066
      %v1068 = vpop.f32.mrb[0].mxu0
      %v1069 = vadd.f32 %v975, %v1068
      %v1070 = vpop.f32.mrb[0].mxu0
      %1071 = vmatprep.mubr.f32.mxu0 0.0
      %v1072 = vand.u32 %v186, 4294901760
      %v1073 = vsub.f32 %v186, %v1072
      %1074 = vmatmul.mubr.f32.gmra.mrb[0].mxu0 %v1073
      %v1075 = vpop.f32.mrb[0].mxu0
      %v1076 = vadd.f32 %v981, %v1075
      %v1077 = vpop.f32.mrb[0].mxu0
      %1078 = vmatprep.mubr.f32.mxu0 0.0
      %v1079 = vand.u32 %v189, 4294901760
      %v1080 = vsub.f32 %v189, %v1079
      %1081 = vmatmul.mubr.f32.gmra.mrb[0].mxu0 %v1080
      %v1082 = vpop.f32.mrb[0].mxu0
      %v1083 = vadd.f32 %v987, %v1082
      %v1084 = vpop.f32.mrb[0].mxu0
      %1085 = vmatprep.mubr.f32.mxu0 0.0
      %v1086 = vand.u32 %v192, 4294901760
      %v1087 = vsub.f32 %v192, %v1086
      %1088 = vmatmul.mubr.f32.gmra.mrb[0].mxu0 %v1087
      %v1089 = vpop.f32.mrb[0].mxu0
      %v1090 = vadd.f32 %v993, %v1089
      %v1091 = vpop.f32.mrb[0].mxu0
      %1092 = vdwg.mxu0
      %1093 = vmatprep.subr.mxu0 0.0
      %v1094 = vand.u32 %v788, 4294901760
      %1095 = vmatpush1.msra.mxu0 %v1094
      %1096 = vmatprep.subr.mxu0 0.0
      %v1097 = vand.u32 %v789, 4294901760
      %1098 = vmatpush1.msra.mxu0 %v1097
      %1099 = vmatprep.subr.mxu0 0.0
      %1100 = vmatpush1.msra.mxu0 0.0
      %1101 = vmatprep.subr.mxu0 0.0
      %1102 = vmatpush1.msra.mxu0 0.0
      %1103 = vmatprep.subr.mxu0 0.0
      %1104 = vmatpush1.msra.mxu0 0.0
      %1105 = vmatprep.subr.mxu0 0.0
      %1106 = vmatpush1.msra.mxu0 0.0
      %1107 = vmatprep.subr.mxu0 0.0
      %1108 = vmatpush1.msra.mxu0 0.0
      %1109 = vmatprep.subr.mxu0 0.0
      %1110 = vmatpush1.msra.mxu0 0.0
      %1111 = vmatprep.subr.mxu0 0.0
      %1112 = vmatpush1.msra.mxu0 0.0
      %1113 = vmatprep.subr.mxu0 0.0
      %1114 = vmatpush1.msra.mxu0 0.0
      %1115 = vmatprep.subr.mxu0 0.0
      %1116 = vmatpush1.msra.mxu0 0.0
      %1117 = vmatprep.subr.mxu0 0.0
      %1118 = vmatpush1.msra.mxu0 0.0
      %1119 = vmatprep.subr.mxu0 0.0
      %1120 = vmatpush1.msra.mxu0 0.0
      %1121 = vmatprep.subr.mxu0 0.0
      %1122 = vmatpush1.msra.mxu0 0.0
      %1123 = vmatprep.subr.mxu0 0.0
      %1124 = vmatpush1.msra.mxu0 0.0
      %1125 = vmatprep.subr.mxu0 0.0
      %1126 = vmatpush1.msra.mxu0 0.0
      %1127 = vmatprep.subr.mxu0 0.0
      %1128 = vmatpush1.msra.mxu0 0.0
      %1129 = vmatprep.subr.mxu0 0.0
      %1130 = vmatpush1.msra.mxu0 0.0
      %1131 = vmatprep.subr.mxu0 0.0
      %1132 = vmatpush1.msra.mxu0 0.0
      %1133 = vmatprep.subr.mxu0 0.0
      %1134 = vmatpush1.msra.mxu0 0.0
      %1135 = vmatprep.subr.mxu0 0.0
      %1136 = vmatpush1.msra.mxu0 0.0
      %1137 = vmatprep.subr.mxu0 0.0
      %1138 = vmatpush1.msra.mxu0 0.0
      %1139 = vmatprep.subr.mxu0 0.0
      %1140 = vmatpush1.msra.mxu0 0.0
      %1141 = vmatprep.subr.mxu0 0.0
      %1142 = vmatpush1.msra.mxu0 0.0
      %1143 = vmatprep.subr.mxu0 0.0
      %1144 = vmatpush1.msra.mxu0 0.0
      %1145 = vmatprep.subr.mxu0 0.0
      %1146 = vmatpush1.msra.mxu0 0.0
      %1147 = vmatprep.subr.mxu0 0.0
      %1148 = vmatpush1.msra.mxu0 0.0
      %1149 = vmatprep.subr.mxu0 0.0
      %1150 = vmatpush1.msra.mxu0 0.0
      %1151 = vmatprep.subr.mxu0 0.0
      %1152 = vmatpush1.msra.mxu0 0.0
      %1153 = vmatprep.subr.mxu0 0.0
      %1154 = vmatpush1.msra.mxu0 0.0
      %1155 = vmatprep.subr.mxu0 0.0
      %1156 = vmatpush1.msra.mxu0 0.0
      %1157 = vmatprep.subr.mxu0 0.0
      %1158 = vmatpush1.msra.mxu0 0.0
      %1159 = vmatprep.mubr.f32.mxu0 0.0
      %v1160 = vand.u32 %v183, 4294901760
      %v1161 = vsub.f32 %v183, %v1160
      %v1162 = vand.u32 %v1161, 4294901760
      %1163 = vmatmul.mubr.f32.gmra.mrb[0].mxu0 %v1162
      %v1164 = vpop.f32.mrb[0].mxu0
      %v1165 = vadd.f32 %v1069, %v1164
      %v1166 = vpop.f32.mrb[0].mxu0
      %1167 = vmatprep.mubr.f32.mxu0 0.0
      %v1168 = vand.u32 %v186, 4294901760
      %v1169 = vsub.f32 %v186, %v1168
      %v1170 = vand.u32 %v1169, 4294901760
      %1171 = vmatmul.mubr.f32.gmra.mrb[0].mxu0 %v1170
      %v1172 = vpop.f32.mrb[0].mxu0
      %v1173 = vadd.f32 %v1076, %v1172
      %v1174 = vpop.f32.mrb[0].mxu0
      %1175 = vmatprep.mubr.f32.mxu0 0.0
      %v1176 = vand.u32 %v189, 4294901760
      %v1177 = vsub.f32 %v189, %v1176
      %v1178 = vand.u32 %v1177, 4294901760
      %1179 = vmatmul.mubr.f32.gmra.mrb[0].mxu0 %v1178
      %v1180 = vpop.f32.mrb[0].mxu0
      %v1181 = vadd.f32 %v1083, %v1180
      %v1182 = vpop.f32.mrb[0].mxu0
      %1183 = vmatprep.mubr.f32.mxu0 0.0
      %v1184 = vand.u32 %v192, 4294901760
      %v1185 = vsub.f32 %v192, %v1184
      %v1186 = vand.u32 %v1185, 4294901760
      %1187 = vmatmul.mubr.f32.gmra.mrb[0].mxu0 %v1186
      %v1188 = vpop.f32.mrb[0].mxu0
      %v1189 = vadd.f32 %v1090, %v1188
      %v1190 = vpop.f32.mrb[0].mxu0
      %1191 = vdwg.mxu0
      %1192 = vmatprep.subr.mxu0 0.0
      %v1193 = vand.u32 %v788, 4294901760
      %v1194 = vsub.f32 %v788, %v1193
      %v1195 = vand.u32 %v1194, 4294901760
      %1196 = vmatpush1.msra.mxu0 %v1195
      %1197 = vmatprep.subr.mxu0 0.0
      %v1198 = vand.u32 %v789, 4294901760
      %v1199 = vsub.f32 %v789, %v1198
      %v1200 = vand.u32 %v1199, 4294901760
      %1201 = vmatpush1.msra.mxu0 %v1200
      %1202 = vmatprep.subr.mxu0 0.0
      %1203 = vmatpush1.msra.mxu0 0.0
      %1204 = vmatprep.subr.mxu0 0.0
      %1205 = vmatpush1.msra.mxu0 0.0
      %1206 = vmatprep.subr.mxu0 0.0
      %1207 = vmatpush1.msra.mxu0 0.0
      %1208 = vmatprep.subr.mxu0 0.0
      %1209 = vmatpush1.msra.mxu0 0.0
      %1210 = vmatprep.subr.mxu0 0.0
      %1211 = vmatpush1.msra.mxu0 0.0
      %1212 = vmatprep.subr.mxu0 0.0
      %1213 = vmatpush1.msra.mxu0 0.0
      %1214 = vmatprep.subr.mxu0 0.0
      %1215 = vmatpush1.msra.mxu0 0.0
      %1216 = vmatprep.subr.mxu0 0.0
      %1217 = vmatpush1.msra.mxu0 0.0
      %1218 = vmatprep.subr.mxu0 0.0
      %1219 = vmatpush1.msra.mxu0 0.0
      %1220 = vmatprep.subr.mxu0 0.0
      %1221 = vmatpush1.msra.mxu0 0.0
      %1222 = vmatprep.subr.mxu0 0.0
      %1223 = vmatpush1.msra.mxu0 0.0
      %1224 = vmatprep.subr.mxu0 0.0
      %1225 = vmatpush1.msra.mxu0 0.0
      %1226 = vmatprep.subr.mxu0 0.0
      %1227 = vmatpush1.msra.mxu0 0.0
      %1228 = vmatprep.subr.mxu0 0.0
      %1229 = vmatpush1.msra.mxu0 0.0
      %1230 = vmatprep.subr.mxu0 0.0
      %1231 = vmatpush1.msra.mxu0 0.0
      %1232 = vmatprep.subr.mxu0 0.0
      %1233 = vmatpush1.msra.mxu0 0.0
      %1234 = vmatprep.subr.mxu0 0.0
      %1235 = vmatpush1.msra.mxu0 0.0
      %1236 = vmatprep.subr.mxu0 0.0
      %1237 = vmatpush1.msra.mxu0 0.0
      %1238 = vmatprep.subr.mxu0 0.0
      %1239 = vmatpush1.msra.mxu0 0.0
      %1240 = vmatprep.subr.mxu0 0.0
      %1241 = vmatpush1.msra.mxu0 0.0
      %1242 = vmatprep.subr.mxu0 0.0
      %1243 = vmatpush1.msra.mxu0 0.0
      %1244 = vmatprep.subr.mxu0 0.0
      %1245 = vmatpush1.msra.mxu0 0.0
      %1246 = vmatprep.subr.mxu0 0.0
      %1247 = vmatpush1.msra.mxu0 0.0
      %1248 = vmatprep.subr.mxu0 0.0
      %1249 = vmatpush1.msra.mxu0 0.0
      %1250 = vmatprep.subr.mxu0 0.0
      %1251 = vmatpush1.msra.mxu0 0.0
      %1252 = vmatprep.subr.mxu0 0.0
      %1253 = vmatpush1.msra.mxu0 0.0
      %1254 = vmatprep.subr.mxu0 0.0
      %1255 = vmatpush1.msra.mxu0 0.0
      %1256 = vmatprep.subr.mxu0 0.0
      %1257 = vmatpush1.msra.mxu0 0.0
      %1258 = vmatprep.subr.mxu0 0.0
      %1259 = vmatpush1.msra.mxu0 0.0
      %1260 = vmatprep.subr.mxu0 0.0
      %1261 = vmatpush1.msra.mxu0 0.0
      %1262 = vmatprep.mubr.f32.mxu0 0.0
      %v1263 = vand.u32 %v183, 4294901760
      %1264 = vmatmul.mubr.f32.gmra.mrb[0].mxu0 %v1263
      %v1265 = vpop.f32.mrb[0].mxu0
      %v1266 = vadd.f32 %v1165, %v1265
      %v1267 = vpop.f32.mrb[0].mxu0
      %1268 = vmatprep.mubr.f32.mxu0 0.0
      %v1269 = vand.u32 %v186, 4294901760
      %1270 = vmatmul.mubr.f32.gmra.mrb[0].mxu0 %v1269
      %v1271 = vpop.f32.mrb[0].mxu0
      %v1272 = vadd.f32 %v1173, %v1271
      %v1273 = vpop.f32.mrb[0].mxu0
      %1274 = vmatprep.mubr.f32.mxu0 0.0
      %v1275 = vand.u32 %v189, 4294901760
      %1276 = vmatmul.mubr.f32.gmra.mrb[0].mxu0 %v1275
      %v1277 = vpop.f32.mrb[0].mxu0
      %v1278 = vadd.f32 %v1181, %v1277
      %v1279 = vpop.f32.mrb[0].mxu0
      %1280 = vmatprep.mubr.f32.mxu0 0.0
      %v1281 = vand.u32 %v192, 4294901760
      %1282 = vmatmul.mubr.f32.gmra.mrb[0].mxu0 %v1281
      %v1283 = vpop.f32.mrb[0].mxu0
      %v1284 = vadd.f32 %v1189, %v1283
      %v1285 = vpop.f32.mrb[0].mxu0
      %1286 = vdwg.mxu0
      %1287 = vmatprep.subr.mxu0 0.0
      %v1288 = vand.u32 %v788, 4294901760
      %1289 = vmatpush1.msra.mxu0 %v1288
      %1290 = vmatprep.subr.mxu0 0.0
      %v1291 = vand.u32 %v789, 4294901760
      %1292 = vmatpush1.msra.mxu0 %v1291
      %1293 = vmatprep.subr.mxu0 0.0
      %1294 = vmatpush1.msra.mxu0 0.0
      %1295 = vmatprep.subr.mxu0 0.0
      %1296 = vmatpush1.msra.mxu0 0.0
      %1297 = vmatprep.subr.mxu0 0.0
      %1298 = vmatpush1.msra.mxu0 0.0
      %1299 = vmatprep.subr.mxu0 0.0
      %1300 = vmatpush1.msra.mxu0 0.0
      %1301 = vmatprep.subr.mxu0 0.0
      %1302 = vmatpush1.msra.mxu0 0.0
      %1303 = vmatprep.subr.mxu0 0.0
      %1304 = vmatpush1.msra.mxu0 0.0
      %1305 = vmatprep.subr.mxu0 0.0
      %1306 = vmatpush1.msra.mxu0 0.0
      %1307 = vmatprep.subr.mxu0 0.0
      %1308 = vmatpush1.msra.mxu0 0.0
      %1309 = vmatprep.subr.mxu0 0.0
      %1310 = vmatpush1.msra.mxu0 0.0
      %1311 = vmatprep.subr.mxu0 0.0
      %1312 = vmatpush1.msra.mxu0 0.0
      %1313 = vmatprep.subr.mxu0 0.0
      %1314 = vmatpush1.msra.mxu0 0.0
      %1315 = vmatprep.subr.mxu0 0.0
      %1316 = vmatpush1.msra.mxu0 0.0
      %1317 = vmatprep.subr.mxu0 0.0
      %1318 = vmatpush1.msra.mxu0 0.0
      %1319 = vmatprep.subr.mxu0 0.0
      %1320 = vmatpush1.msra.mxu0 0.0
      %1321 = vmatprep.subr.mxu0 0.0
      %1322 = vmatpush1.msra.mxu0 0.0
      %1323 = vmatprep.subr.mxu0 0.0
      %1324 = vmatpush1.msra.mxu0 0.0
      %1325 = vmatprep.subr.mxu0 0.0
      %1326 = vmatpush1.msra.mxu0 0.0
      %1327 = vmatprep.subr.mxu0 0.0
      %1328 = vmatpush1.msra.mxu0 0.0
      %1329 = vmatprep.subr.mxu0 0.0
      %1330 = vmatpush1.msra.mxu0 0.0
      %1331 = vmatprep.subr.mxu0 0.0
      %1332 = vmatpush1.msra.mxu0 0.0
      %1333 = vmatprep.subr.mxu0 0.0
      %1334 = vmatpush1.msra.mxu0 0.0
      %1335 = vmatprep.subr.mxu0 0.0
      %1336 = vmatpush1.msra.mxu0 0.0
      %1337 = vmatprep.subr.mxu0 0.0
      %1338 = vmatpush1.msra.mxu0 0.0
      %1339 = vmatprep.subr.mxu0 0.0
      %1340 = vmatpush1.msra.mxu0 0.0
      %1341 = vmatprep.subr.mxu0 0.0
      %1342 = vmatpush1.msra.mxu0 0.0
      %1343 = vmatprep.subr.mxu0 0.0
      %1344 = vmatpush1.msra.mxu0 0.0
      %1345 = vmatprep.subr.mxu0 0.0
      %1346 = vmatpush1.msra.mxu0 0.0
      %1347 = vmatprep.subr.mxu0 0.0
      %1348 = vmatpush1.msra.mxu0 0.0
      %1349 = vmatprep.subr.mxu0 0.0
      %1350 = vmatpush1.msra.mxu0 0.0
      %1351 = vmatprep.subr.mxu0 0.0
      %1352 = vmatpush1.msra.mxu0 0.0
      %1353 = vmatprep.mubr.f32.mxu0 0.0
      %v1354 = vand.u32 %v183, 4294901760
      %1355 = vmatmul.mubr.f32.gmra.mrb[0].mxu0 %v1354
      %v1356 = vpop.f32.mrb[0].mxu0
      %v1357 = vadd.f32 %v1266, %v1356
      %v1358 = vpop.f32.mrb[0].mxu0
      %1359 = vmatprep.mubr.f32.mxu0 0.0
      %v1360 = vand.u32 %v186, 4294901760
      %1361 = vmatmul.mubr.f32.gmra.mrb[0].mxu0 %v1360
      %v1362 = vpop.f32.mrb[0].mxu0
      %v1363 = vadd.f32 %v1272, %v1362
      %v1364 = vpop.f32.mrb[0].mxu0
      %1365 = vmatprep.mubr.f32.mxu0 0.0
      %v1366 = vand.u32 %v189, 4294901760
      %1367 = vmatmul.mubr.f32.gmra.mrb[0].mxu0 %v1366
      %v1368 = vpop.f32.mrb[0].mxu0
      %v1369 = vadd.f32 %v1278, %v1368
      %v1370 = vpop.f32.mrb[0].mxu0
      %1371 = vmatprep.mubr.f32.mxu0 0.0
      %v1372 = vand.u32 %v192, 4294901760
      %1373 = vmatmul.mubr.f32.gmra.mrb[0].mxu0 %v1372
      %v1374 = vpop.f32.mrb[0].mxu0
      %v1375 = vadd.f32 %v1284, %v1374
      %v1376 = vpop.f32.mrb[0].mxu0
      %1377 = vdwg.mxu0
      %s1378 = scalar_lea.vmem %s174, 32
      %1379 = vst.msk [vmem:[%s1378] sm:$0xff] %vm782, %v1357
      %1380 = vst.msk [vmem:[%s1378 + $0x8] sm:$0xff] %vm782, %v1363
      %1381 = vst.msk [vmem:[%s1378 + $0x10] sm:$0xff] %vm782, %v1369
      %1382 = vst.msk [vmem:[%s1378 + $0x18] sm:$0xff] %vm782, %v1375
      %v1383 = vld [vmem:[%s166] sm:$0xff]
      %v1384 = vld [vmem:[%s166 + $0x8] sm:$0xff]
      %v1385 = vld [vmem:[%s166 + $0x10] sm:$0xff]
      %v1386 = vld [vmem:[%s166 + $0x18] sm:$0xff]
      %v1387 = vld [vmem:[%s0] sm:$0xff]
      %v1388 = vld [vmem:[%s0 + $0x8] sm:$0xff]
      %1393 = vrot.lane.b32.xlu0 %v1383, 112
      %v1394 = vpop.permute.xlu0 %1393
      %1395 = vrot.lane.b32.xlu0 %v1384, 112
      %v1396 = vpop.permute.xlu0 %1395
      %1397 = vrot.lane.b32.xlu0 %v1385, 112
      %v1398 = vpop.permute.xlu0 %1397
      %1399 = vrot.lane.b32.xlu0 %v1386, 112
      %v1400 = vpop.permute.xlu0 %1399
      %v1401 = vsel %vm181, %v1394, 0
      %v1403 = vsel %vm181, %v1396, 0
      %v1405 = vsel %vm181, %v1398, 0
      %v1407 = vsel %vm181, %v1400, 0
      %1409 = vmatprep.subr.mxu0 0.0
      %v1410 = vand.u32 %v1387, 4294901760
      %1411 = vmatpush1.msra.mxu0 %v1410
      %1412 = vmatprep.subr.mxu0 0.0
      %v1413 = vand.u32 %v1388, 4294901760
      %1414 = vmatpush1.msra.mxu0 %v1413
      %1415 = vmatprep.subr.mxu0 0.0
      %1416 = vmatpush1.msra.mxu0 0.0
      %1417 = vmatprep.subr.mxu0 0.0
      %1418 = vmatpush1.msra.mxu0 0.0
      %1419 = vmatprep.subr.mxu0 0.0
      %1420 = vmatpush1.msra.mxu0 0.0
      %1421 = vmatprep.subr.mxu0 0.0
      %1422 = vmatpush1.msra.mxu0 0.0
      %1423 = vmatprep.subr.mxu0 0.0
      %1424 = vmatpush1.msra.mxu0 0.0
      %1425 = vmatprep.subr.mxu0 0.0
      %1426 = vmatpush1.msra.mxu0 0.0
      %1427 = vmatprep.subr.mxu0 0.0
      %1428 = vmatpush1.msra.mxu0 0.0
      %1429 = vmatprep.subr.mxu0 0.0
      %1430 = vmatpush1.msra.mxu0 0.0
      %1431 = vmatprep.subr.mxu0 0.0
      %1432 = vmatpush1.msra.mxu0 0.0
      %1433 = vmatprep.subr.mxu0 0.0
      %1434 = vmatpush1.msra.mxu0 0.0
      %1435 = vmatprep.subr.mxu0 0.0
      %1436 = vmatpush1.msra.mxu0 0.0
      %1437 = vmatprep.subr.mxu0 0.0
      %1438 = vmatpush1.msra.mxu0 0.0
      %1439 = vmatprep.subr.mxu0 0.0
      %1440 = vmatpush1.msra.mxu0 0.0
      %1441 = vmatprep.subr.mxu0 0.0
      %1442 = vmatpush1.msra.mxu0 0.0
      %1443 = vmatprep.subr.mxu0 0.0
      %1444 = vmatpush1.msra.mxu0 0.0
      %1445 = vmatprep.subr.mxu0 0.0
      %1446 = vmatpush1.msra.mxu0 0.0
      %1447 = vmatprep.subr.mxu0 0.0
      %1448 = vmatpush1.msra.mxu0 0.0
      %1449 = vmatprep.subr.mxu0 0.0
      %1450 = vmatpush1.msra.mxu0 0.0
      %1451 = vmatprep.subr.mxu0 0.0
      %1452 = vmatpush1.msra.mxu0 0.0
      %1453 = vmatprep.subr.mxu0 0.0
      %1454 = vmatpush1.msra.mxu0 0.0
      %1455 = vmatprep.subr.mxu0 0.0
      %1456 = vmatpush1.msra.mxu0 0.0
      %1457 = vmatprep.subr.mxu0 0.0
      %1458 = vmatpush1.msra.mxu0 0.0
      %1459 = vmatprep.subr.mxu0 0.0
      %1460 = vmatpush1.msra.mxu0 0.0
      %1461 = vmatprep.subr.mxu0 0.0
      %1462 = vmatpush1.msra.mxu0 0.0
      %1463 = vmatprep.subr.mxu0 0.0
      %1464 = vmatpush1.msra.mxu0 0.0
      %1465 = vmatprep.subr.mxu0 0.0
      %1466 = vmatpush1.msra.mxu0 0.0
      %1467 = vmatprep.subr.mxu0 0.0
      %1468 = vmatpush1.msra.mxu0 0.0
      %1469 = vmatprep.subr.mxu0 0.0
      %1470 = vmatpush1.msra.mxu0 0.0
      %1471 = vmatprep.subr.mxu0 0.0
      %1472 = vmatpush1.msra.mxu0 0.0
      %1473 = vmatprep.subr.mxu0 0.0
      %1474 = vmatpush1.msra.mxu0 0.0
      %1475 = vmatprep.mubr.f32.mxu0 0.0
      %v1476 = vand.u32 %v1401, 4294901760
      %v1477 = vsub.f32 %v1401, %v1476
      %v1478 = vand.u32 %v1477, 4294901760
      %v1479 = vsub.f32 %v1477, %v1478
      %v1480 = vand.u32 %v1479, 4294901760
      %1481 = vmatmul.mubr.f32.gmra.mrb[0].mxu0 %v1480
      %v1482 = vpop.f32.mrb[0].mxu0
      %v1483 = vadd.f32 0.0, %v1482
      %v1484 = vpop.f32.mrb[0].mxu0
      %1485 = vmatprep.mubr.f32.mxu0 0.0
      %v1486 = vand.u32 %v1403, 4294901760
      %v1487 = vsub.f32 %v1403, %v1486
      %v1488 = vand.u32 %v1487, 4294901760
      %v1489 = vsub.f32 %v1487, %v1488
      %v1490 = vand.u32 %v1489, 4294901760
      %1491 = vmatmul.mubr.f32.gmra.mrb[0].mxu0 %v1490
      %v1492 = vpop.f32.mrb[0].mxu0
      %v1493 = vadd.f32 0.0, %v1492
      %v1494 = vpop.f32.mrb[0].mxu0
      %1495 = vmatprep.mubr.f32.mxu0 0.0
      %v1496 = vand.u32 %v1405, 4294901760
      %v1497 = vsub.f32 %v1405, %v1496
      %v1498 = vand.u32 %v1497, 4294901760
      %v1499 = vsub.f32 %v1497, %v1498
      %v1500 = vand.u32 %v1499, 4294901760
      %1501 = vmatmul.mubr.f32.gmra.mrb[0].mxu0 %v1500
      %v1502 = vpop.f32.mrb[0].mxu0
      %v1503 = vadd.f32 0.0, %v1502
      %v1504 = vpop.f32.mrb[0].mxu0
      %1505 = vmatprep.mubr.f32.mxu0 0.0
      %v1506 = vand.u32 %v1407, 4294901760
      %v1507 = vsub.f32 %v1407, %v1506
      %v1508 = vand.u32 %v1507, 4294901760
      %v1509 = vsub.f32 %v1507, %v1508
      %v1510 = vand.u32 %v1509, 4294901760
      %1511 = vmatmul.mubr.f32.gmra.mrb[0].mxu0 %v1510
      %v1512 = vpop.f32.mrb[0].mxu0
      %v1513 = vadd.f32 0.0, %v1512
      %v1514 = vpop.f32.mrb[0].mxu0
      %1515 = vdwg.mxu0
      %1516 = vmatprep.subr.mxu0 0.0
      %v1517 = vand.u32 %v1387, 4294901760
      %v1518 = vsub.f32 %v1387, %v1517
      %v1519 = vand.u32 %v1518, 4294901760
      %v1520 = vsub.f32 %v1518, %v1519
      %v1521 = vand.u32 %v1520, 4294901760
      %1522 = vmatpush1.msra.mxu0 %v1521
      %1523 = vmatprep.subr.mxu0 0.0
      %v1524 = vand.u32 %v1388, 4294901760
      %v1525 = vsub.f32 %v1388, %v1524
      %v1526 = vand.u32 %v1525, 4294901760
      %v1527 = vsub.f32 %v1525, %v1526
      %v1528 = vand.u32 %v1527, 4294901760
      %1529 = vmatpush1.msra.mxu0 %v1528
      %1530 = vmatprep.subr.mxu0 0.0
      %1531 = vmatpush1.msra.mxu0 0.0
      %1532 = vmatprep.subr.mxu0 0.0
      %1533 = vmatpush1.msra.mxu0 0.0
      %1534 = vmatprep.subr.mxu0 0.0
      %1535 = vmatpush1.msra.mxu0 0.0
      %1536 = vmatprep.subr.mxu0 0.0
      %1537 = vmatpush1.msra.mxu0 0.0
      %1538 = vmatprep.subr.mxu0 0.0
      %1539 = vmatpush1.msra.mxu0 0.0
      %1540 = vmatprep.subr.mxu0 0.0
      %1541 = vmatpush1.msra.mxu0 0.0
      %1542 = vmatprep.subr.mxu0 0.0
      %1543 = vmatpush1.msra.mxu0 0.0
      %1544 = vmatprep.subr.mxu0 0.0
      %1545 = vmatpush1.msra.mxu0 0.0
      %1546 = vmatprep.subr.mxu0 0.0
      %1547 = vmatpush1.msra.mxu0 0.0
      %1548 = vmatprep.subr.mxu0 0.0
      %1549 = vmatpush1.msra.mxu0 0.0
      %1550 = vmatprep.subr.mxu0 0.0
      %1551 = vmatpush1.msra.mxu0 0.0
      %1552 = vmatprep.subr.mxu0 0.0
      %1553 = vmatpush1.msra.mxu0 0.0
      %1554 = vmatprep.subr.mxu0 0.0
      %1555 = vmatpush1.msra.mxu0 0.0
      %1556 = vmatprep.subr.mxu0 0.0
      %1557 = vmatpush1.msra.mxu0 0.0
      %1558 = vmatprep.subr.mxu0 0.0
      %1559 = vmatpush1.msra.mxu0 0.0
      %1560 = vmatprep.subr.mxu0 0.0
      %1561 = vmatpush1.msra.mxu0 0.0
      %1562 = vmatprep.subr.mxu0 0.0
      %1563 = vmatpush1.msra.mxu0 0.0
      %1564 = vmatprep.subr.mxu0 0.0
      %1565 = vmatpush1.msra.mxu0 0.0
      %1566 = vmatprep.subr.mxu0 0.0
      %1567 = vmatpush1.msra.mxu0 0.0
      %1568 = vmatprep.subr.mxu0 0.0
      %1569 = vmatpush1.msra.mxu0 0.0
      %1570 = vmatprep.subr.mxu0 0.0
      %1571 = vmatpush1.msra.mxu0 0.0
      %1572 = vmatprep.subr.mxu0 0.0
      %1573 = vmatpush1.msra.mxu0 0.0
      %1574 = vmatprep.subr.mxu0 0.0
      %1575 = vmatpush1.msra.mxu0 0.0
      %1576 = vmatprep.subr.mxu0 0.0
      %1577 = vmatpush1.msra.mxu0 0.0
      %1578 = vmatprep.subr.mxu0 0.0
      %1579 = vmatpush1.msra.mxu0 0.0
      %1580 = vmatprep.subr.mxu0 0.0
      %1581 = vmatpush1.msra.mxu0 0.0
      %1582 = vmatprep.subr.mxu0 0.0
      %1583 = vmatpush1.msra.mxu0 0.0
      %1584 = vmatprep.subr.mxu0 0.0
      %1585 = vmatpush1.msra.mxu0 0.0
      %1586 = vmatprep.subr.mxu0 0.0
      %1587 = vmatpush1.msra.mxu0 0.0
      %1588 = vmatprep.subr.mxu0 0.0
      %1589 = vmatpush1.msra.mxu0 0.0
      %1590 = vmatprep.mubr.f32.mxu0 0.0
      %v1591 = vand.u32 %v1401, 4294901760
      %1592 = vmatmul.mubr.f32.gmra.mrb[0].mxu0 %v1591
      %v1593 = vpop.f32.mrb[0].mxu0
      %v1594 = vadd.f32 %v1483, %v1593
      %v1595 = vpop.f32.mrb[0].mxu0
      %1596 = vmatprep.mubr.f32.mxu0 0.0
      %v1597 = vand.u32 %v1403, 4294901760
      %1598 = vmatmul.mubr.f32.gmra.mrb[0].mxu0 %v1597
      %v1599 = vpop.f32.mrb[0].mxu0
      %v1600 = vadd.f32 %v1493, %v1599
      %v1601 = vpop.f32.mrb[0].mxu0
      %1602 = vmatprep.mubr.f32.mxu0 0.0
      %v1603 = vand.u32 %v1405, 4294901760
      %1604 = vmatmul.mubr.f32.gmra.mrb[0].mxu0 %v1603
      %v1605 = vpop.f32.mrb[0].mxu0
      %v1606 = vadd.f32 %v1503, %v1605
      %v1607 = vpop.f32.mrb[0].mxu0
      %1608 = vmatprep.mubr.f32.mxu0 0.0
      %v1609 = vand.u32 %v1407, 4294901760
      %1610 = vmatmul.mubr.f32.gmra.mrb[0].mxu0 %v1609
      %v1611 = vpop.f32.mrb[0].mxu0
      %v1612 = vadd.f32 %v1513, %v1611
      %v1613 = vpop.f32.mrb[0].mxu0
      %1614 = vdwg.mxu0
      %1615 = vmatprep.subr.mxu0 0.0
      %v1616 = vand.u32 %v1387, 4294901760
      %v1617 = vsub.f32 %v1387, %v1616
      %1618 = vmatpush1.msra.mxu0 %v1617
      %1619 = vmatprep.subr.mxu0 0.0
      %v1620 = vand.u32 %v1388, 4294901760
      %v1621 = vsub.f32 %v1388, %v1620
      %1622 = vmatpush1.msra.mxu0 %v1621
      %1623 = vmatprep.subr.mxu0 0.0
      %1624 = vmatpush1.msra.mxu0 0.0
      %1625 = vmatprep.subr.mxu0 0.0
      %1626 = vmatpush1.msra.mxu0 0.0
      %1627 = vmatprep.subr.mxu0 0.0
      %1628 = vmatpush1.msra.mxu0 0.0
      %1629 = vmatprep.subr.mxu0 0.0
      %1630 = vmatpush1.msra.mxu0 0.0
      %1631 = vmatprep.subr.mxu0 0.0
      %1632 = vmatpush1.msra.mxu0 0.0
      %1633 = vmatprep.subr.mxu0 0.0
      %1634 = vmatpush1.msra.mxu0 0.0
      %1635 = vmatprep.subr.mxu0 0.0
      %1636 = vmatpush1.msra.mxu0 0.0
      %1637 = vmatprep.subr.mxu0 0.0
      %1638 = vmatpush1.msra.mxu0 0.0
      %1639 = vmatprep.subr.mxu0 0.0
      %1640 = vmatpush1.msra.mxu0 0.0
      %1641 = vmatprep.subr.mxu0 0.0
      %1642 = vmatpush1.msra.mxu0 0.0
      %1643 = vmatprep.subr.mxu0 0.0
      %1644 = vmatpush1.msra.mxu0 0.0
      %1645 = vmatprep.subr.mxu0 0.0
      %1646 = vmatpush1.msra.mxu0 0.0
      %1647 = vmatprep.subr.mxu0 0.0
      %1648 = vmatpush1.msra.mxu0 0.0
      %1649 = vmatprep.subr.mxu0 0.0
      %1650 = vmatpush1.msra.mxu0 0.0
      %1651 = vmatprep.subr.mxu0 0.0
      %1652 = vmatpush1.msra.mxu0 0.0
      %1653 = vmatprep.subr.mxu0 0.0
      %1654 = vmatpush1.msra.mxu0 0.0
      %1655 = vmatprep.subr.mxu0 0.0
      %1656 = vmatpush1.msra.mxu0 0.0
      %1657 = vmatprep.subr.mxu0 0.0
      %1658 = vmatpush1.msra.mxu0 0.0
      %1659 = vmatprep.subr.mxu0 0.0
      %1660 = vmatpush1.msra.mxu0 0.0
      %1661 = vmatprep.subr.mxu0 0.0
      %1662 = vmatpush1.msra.mxu0 0.0
      %1663 = vmatprep.subr.mxu0 0.0
      %1664 = vmatpush1.msra.mxu0 0.0
      %1665 = vmatprep.subr.mxu0 0.0
      %1666 = vmatpush1.msra.mxu0 0.0
      %1667 = vmatprep.subr.mxu0 0.0
      %1668 = vmatpush1.msra.mxu0 0.0
      %1669 = vmatprep.subr.mxu0 0.0
      %1670 = vmatpush1.msra.mxu0 0.0
      %1671 = vmatprep.subr.mxu0 0.0
      %1672 = vmatpush1.msra.mxu0 0.0
      %1673 = vmatprep.subr.mxu0 0.0
      %1674 = vmatpush1.msra.mxu0 0.0
      %1675 = vmatprep.subr.mxu0 0.0
      %1676 = vmatpush1.msra.mxu0 0.0
      %1677 = vmatprep.subr.mxu0 0.0
      %1678 = vmatpush1.msra.mxu0 0.0
      %1679 = vmatprep.subr.mxu0 0.0
      %1680 = vmatpush1.msra.mxu0 0.0
      %1681 = vmatprep.subr.mxu0 0.0
      %1682 = vmatpush1.msra.mxu0 0.0
      %1683 = vmatprep.mubr.f32.mxu0 0.0
      %v1684 = vand.u32 %v1401, 4294901760
      %v1685 = vsub.f32 %v1401, %v1684
      %1686 = vmatmul.mubr.f32.gmra.mrb[0].mxu0 %v1685
      %v1687 = vpop.f32.mrb[0].mxu0
      %v1688 = vadd.f32 %v1594, %v1687
      %v1689 = vpop.f32.mrb[0].mxu0
      %1690 = vmatprep.mubr.f32.mxu0 0.0
      %v1691 = vand.u32 %v1403, 4294901760
      %v1692 = vsub.f32 %v1403, %v1691
      %1693 = vmatmul.mubr.f32.gmra.mrb[0].mxu0 %v1692
      %v1694 = vpop.f32.mrb[0].mxu0
      %v1695 = vadd.f32 %v1600, %v1694
      %v1696 = vpop.f32.mrb[0].mxu0
      %1697 = vmatprep.mubr.f32.mxu0 0.0
      %v1698 = vand.u32 %v1405, 4294901760
      %v1699 = vsub.f32 %v1405, %v1698
      %1700 = vmatmul.mubr.f32.gmra.mrb[0].mxu0 %v1699
      %v1701 = vpop.f32.mrb[0].mxu0
      %v1702 = vadd.f32 %v1606, %v1701
      %v1703 = vpop.f32.mrb[0].mxu0
      %1704 = vmatprep.mubr.f32.mxu0 0.0
      %v1705 = vand.u32 %v1407, 4294901760
      %v1706 = vsub.f32 %v1407, %v1705
      %1707 = vmatmul.mubr.f32.gmra.mrb[0].mxu0 %v1706
      %v1708 = vpop.f32.mrb[0].mxu0
      %v1709 = vadd.f32 %v1612, %v1708
      %v1710 = vpop.f32.mrb[0].mxu0
      %1711 = vdwg.mxu0
      %1712 = vmatprep.subr.mxu0 0.0
      %v1713 = vand.u32 %v1387, 4294901760
      %1714 = vmatpush1.msra.mxu0 %v1713
      %1715 = vmatprep.subr.mxu0 0.0
      %v1716 = vand.u32 %v1388, 4294901760
      %1717 = vmatpush1.msra.mxu0 %v1716
      %1718 = vmatprep.subr.mxu0 0.0
      %1719 = vmatpush1.msra.mxu0 0.0
      %1720 = vmatprep.subr.mxu0 0.0
      %1721 = vmatpush1.msra.mxu0 0.0
      %1722 = vmatprep.subr.mxu0 0.0
      %1723 = vmatpush1.msra.mxu0 0.0
      %1724 = vmatprep.subr.mxu0 0.0
      %1725 = vmatpush1.msra.mxu0 0.0
      %1726 = vmatprep.subr.mxu0 0.0
      %1727 = vmatpush1.msra.mxu0 0.0
      %1728 = vmatprep.subr.mxu0 0.0
      %1729 = vmatpush1.msra.mxu0 0.0
      %1730 = vmatprep.subr.mxu0 0.0
      %1731 = vmatpush1.msra.mxu0 0.0
      %1732 = vmatprep.subr.mxu0 0.0
      %1733 = vmatpush1.msra.mxu0 0.0
      %1734 = vmatprep.subr.mxu0 0.0
      %1735 = vmatpush1.msra.mxu0 0.0
      %1736 = vmatprep.subr.mxu0 0.0
      %1737 = vmatpush1.msra.mxu0 0.0
      %1738 = vmatprep.subr.mxu0 0.0
      %1739 = vmatpush1.msra.mxu0 0.0
      %1740 = vmatprep.subr.mxu0 0.0
      %1741 = vmatpush1.msra.mxu0 0.0
      %1742 = vmatprep.subr.mxu0 0.0
      %1743 = vmatpush1.msra.mxu0 0.0
      %1744 = vmatprep.subr.mxu0 0.0
      %1745 = vmatpush1.msra.mxu0 0.0
      %1746 = vmatprep.subr.mxu0 0.0
      %1747 = vmatpush1.msra.mxu0 0.0
      %1748 = vmatprep.subr.mxu0 0.0
      %1749 = vmatpush1.msra.mxu0 0.0
      %1750 = vmatprep.subr.mxu0 0.0
      %1751 = vmatpush1.msra.mxu0 0.0
      %1752 = vmatprep.subr.mxu0 0.0
      %1753 = vmatpush1.msra.mxu0 0.0
      %1754 = vmatprep.subr.mxu0 0.0
      %1755 = vmatpush1.msra.mxu0 0.0
      %1756 = vmatprep.subr.mxu0 0.0
      %1757 = vmatpush1.msra.mxu0 0.0
      %1758 = vmatprep.subr.mxu0 0.0
      %1759 = vmatpush1.msra.mxu0 0.0
      %1760 = vmatprep.subr.mxu0 0.0
      %1761 = vmatpush1.msra.mxu0 0.0
      %1762 = vmatprep.subr.mxu0 0.0
      %1763 = vmatpush1.msra.mxu0 0.0
      %1764 = vmatprep.subr.mxu0 0.0
      %1765 = vmatpush1.msra.mxu0 0.0
      %1766 = vmatprep.subr.mxu0 0.0
      %1767 = vmatpush1.msra.mxu0 0.0
      %1768 = vmatprep.subr.mxu0 0.0
      %1769 = vmatpush1.msra.mxu0 0.0
      %1770 = vmatprep.subr.mxu0 0.0
      %1771 = vmatpush1.msra.mxu0 0.0
      %1772 = vmatprep.subr.mxu0 0.0
      %1773 = vmatpush1.msra.mxu0 0.0
      %1774 = vmatprep.subr.mxu0 0.0
      %1775 = vmatpush1.msra.mxu0 0.0
      %1776 = vmatprep.subr.mxu0 0.0
      %1777 = vmatpush1.msra.mxu0 0.0
      %1778 = vmatprep.mubr.f32.mxu0 0.0
      %v1779 = vand.u32 %v1401, 4294901760
      %v1780 = vsub.f32 %v1401, %v1779
      %v1781 = vand.u32 %v1780, 4294901760
      %1782 = vmatmul.mubr.f32.gmra.mrb[0].mxu0 %v1781
      %v1783 = vpop.f32.mrb[0].mxu0
      %v1784 = vadd.f32 %v1688, %v1783
      %v1785 = vpop.f32.mrb[0].mxu0
      %1786 = vmatprep.mubr.f32.mxu0 0.0
      %v1787 = vand.u32 %v1403, 4294901760
      %v1788 = vsub.f32 %v1403, %v1787
      %v1789 = vand.u32 %v1788, 4294901760
      %1790 = vmatmul.mubr.f32.gmra.mrb[0].mxu0 %v1789
      %v1791 = vpop.f32.mrb[0].mxu0
      %v1792 = vadd.f32 %v1695, %v1791
      %v1793 = vpop.f32.mrb[0].mxu0
      %1794 = vmatprep.mubr.f32.mxu0 0.0
      %v1795 = vand.u32 %v1405, 4294901760
      %v1796 = vsub.f32 %v1405, %v1795
      %v1797 = vand.u32 %v1796, 4294901760
      %1798 = vmatmul.mubr.f32.gmra.mrb[0].mxu0 %v1797
      %v1799 = vpop.f32.mrb[0].mxu0
      %v1800 = vadd.f32 %v1702, %v1799
      %v1801 = vpop.f32.mrb[0].mxu0
      %1802 = vmatprep.mubr.f32.mxu0 0.0
      %v1803 = vand.u32 %v1407, 4294901760
      %v1804 = vsub.f32 %v1407, %v1803
      %v1805 = vand.u32 %v1804, 4294901760
      %1806 = vmatmul.mubr.f32.gmra.mrb[0].mxu0 %v1805
      %v1807 = vpop.f32.mrb[0].mxu0
      %v1808 = vadd.f32 %v1709, %v1807
      %v1809 = vpop.f32.mrb[0].mxu0
      %1810 = vdwg.mxu0
      %1811 = vmatprep.subr.mxu0 0.0
      %v1812 = vand.u32 %v1387, 4294901760
      %v1813 = vsub.f32 %v1387, %v1812
      %v1814 = vand.u32 %v1813, 4294901760
      %1815 = vmatpush1.msra.mxu0 %v1814
      %1816 = vmatprep.subr.mxu0 0.0
      %v1817 = vand.u32 %v1388, 4294901760
      %v1818 = vsub.f32 %v1388, %v1817
      %v1819 = vand.u32 %v1818, 4294901760
      %1820 = vmatpush1.msra.mxu0 %v1819
      %1821 = vmatprep.subr.mxu0 0.0
      %1822 = vmatpush1.msra.mxu0 0.0
      %1823 = vmatprep.subr.mxu0 0.0
      %1824 = vmatpush1.msra.mxu0 0.0
      %1825 = vmatprep.subr.mxu0 0.0
      %1826 = vmatpush1.msra.mxu0 0.0
      %1827 = vmatprep.subr.mxu0 0.0
      %1828 = vmatpush1.msra.mxu0 0.0
      %1829 = vmatprep.subr.mxu0 0.0
      %1830 = vmatpush1.msra.mxu0 0.0
      %1831 = vmatprep.subr.mxu0 0.0
      %1832 = vmatpush1.msra.mxu0 0.0
      %1833 = vmatprep.subr.mxu0 0.0
      %1834 = vmatpush1.msra.mxu0 0.0
      %1835 = vmatprep.subr.mxu0 0.0
      %1836 = vmatpush1.msra.mxu0 0.0
      %1837 = vmatprep.subr.mxu0 0.0
      %1838 = vmatpush1.msra.mxu0 0.0
      %1839 = vmatprep.subr.mxu0 0.0
      %1840 = vmatpush1.msra.mxu0 0.0
      %1841 = vmatprep.subr.mxu0 0.0
      %1842 = vmatpush1.msra.mxu0 0.0
      %1843 = vmatprep.subr.mxu0 0.0
      %1844 = vmatpush1.msra.mxu0 0.0
      %1845 = vmatprep.subr.mxu0 0.0
      %1846 = vmatpush1.msra.mxu0 0.0
      %1847 = vmatprep.subr.mxu0 0.0
      %1848 = vmatpush1.msra.mxu0 0.0
      %1849 = vmatprep.subr.mxu0 0.0
      %1850 = vmatpush1.msra.mxu0 0.0
      %1851 = vmatprep.subr.mxu0 0.0
      %1852 = vmatpush1.msra.mxu0 0.0
      %1853 = vmatprep.subr.mxu0 0.0
      %1854 = vmatpush1.msra.mxu0 0.0
      %1855 = vmatprep.subr.mxu0 0.0
      %1856 = vmatpush1.msra.mxu0 0.0
      %1857 = vmatprep.subr.mxu0 0.0
      %1858 = vmatpush1.msra.mxu0 0.0
      %1859 = vmatprep.subr.mxu0 0.0
      %1860 = vmatpush1.msra.mxu0 0.0
      %1861 = vmatprep.subr.mxu0 0.0
      %1862 = vmatpush1.msra.mxu0 0.0
      %1863 = vmatprep.subr.mxu0 0.0
      %1864 = vmatpush1.msra.mxu0 0.0
      %1865 = vmatprep.subr.mxu0 0.0
      %1866 = vmatpush1.msra.mxu0 0.0
      %1867 = vmatprep.subr.mxu0 0.0
      %1868 = vmatpush1.msra.mxu0 0.0
      %1869 = vmatprep.subr.mxu0 0.0
      %1870 = vmatpush1.msra.mxu0 0.0
      %1871 = vmatprep.subr.mxu0 0.0
      %1872 = vmatpush1.msra.mxu0 0.0
      %1873 = vmatprep.subr.mxu0 0.0
      %1874 = vmatpush1.msra.mxu0 0.0
      %1875 = vmatprep.subr.mxu0 0.0
      %1876 = vmatpush1.msra.mxu0 0.0
      %1877 = vmatprep.subr.mxu0 0.0
      %1878 = vmatpush1.msra.mxu0 0.0
      %1879 = vmatprep.subr.mxu0 0.0
      %1880 = vmatpush1.msra.mxu0 0.0
      %1881 = vmatprep.mubr.f32.mxu0 0.0
      %v1882 = vand.u32 %v1401, 4294901760
      %1883 = vmatmul.mubr.f32.gmra.mrb[0].mxu0 %v1882
      %v1884 = vpop.f32.mrb[0].mxu0
      %v1885 = vadd.f32 %v1784, %v1884
      %v1886 = vpop.f32.mrb[0].mxu0
      %1887 = vmatprep.mubr.f32.mxu0 0.0
      %v1888 = vand.u32 %v1403, 4294901760
      %1889 = vmatmul.mubr.f32.gmra.mrb[0].mxu0 %v1888
      %v1890 = vpop.f32.mrb[0].mxu0
      %v1891 = vadd.f32 %v1792, %v1890
      %v1892 = vpop.f32.mrb[0].mxu0
      %1893 = vmatprep.mubr.f32.mxu0 0.0
      %v1894 = vand.u32 %v1405, 4294901760
      %1895 = vmatmul.mubr.f32.gmra.mrb[0].mxu0 %v1894
      %v1896 = vpop.f32.mrb[0].mxu0
      %v1897 = vadd.f32 %v1800, %v1896
      %v1898 = vpop.f32.mrb[0].mxu0
      %1899 = vmatprep.mubr.f32.mxu0 0.0
      %v1900 = vand.u32 %v1407, 4294901760
      %1901 = vmatmul.mubr.f32.gmra.mrb[0].mxu0 %v1900
      %v1902 = vpop.f32.mrb[0].mxu0
      %v1903 = vadd.f32 %v1808, %v1902
      %v1904 = vpop.f32.mrb[0].mxu0
      %1905 = vdwg.mxu0
      %1906 = vmatprep.subr.mxu0 0.0
      %v1907 = vand.u32 %v1387, 4294901760
      %1908 = vmatpush1.msra.mxu0 %v1907
      %1909 = vmatprep.subr.mxu0 0.0
      %v1910 = vand.u32 %v1388, 4294901760
      %1911 = vmatpush1.msra.mxu0 %v1910
      %1912 = vmatprep.subr.mxu0 0.0
      %1913 = vmatpush1.msra.mxu0 0.0
      %1914 = vmatprep.subr.mxu0 0.0
      %1915 = vmatpush1.msra.mxu0 0.0
      %1916 = vmatprep.subr.mxu0 0.0
      %1917 = vmatpush1.msra.mxu0 0.0
      %1918 = vmatprep.subr.mxu0 0.0
      %1919 = vmatpush1.msra.mxu0 0.0
      %1920 = vmatprep.subr.mxu0 0.0
      %1921 = vmatpush1.msra.mxu0 0.0
      %1922 = vmatprep.subr.mxu0 0.0
      %1923 = vmatpush1.msra.mxu0 0.0
      %1924 = vmatprep.subr.mxu0 0.0
      %1925 = vmatpush1.msra.mxu0 0.0
      %1926 = vmatprep.subr.mxu0 0.0
      %1927 = vmatpush1.msra.mxu0 0.0
      %1928 = vmatprep.subr.mxu0 0.0
      %1929 = vmatpush1.msra.mxu0 0.0
      %1930 = vmatprep.subr.mxu0 0.0
      %1931 = vmatpush1.msra.mxu0 0.0
      %1932 = vmatprep.subr.mxu0 0.0
      %1933 = vmatpush1.msra.mxu0 0.0
      %1934 = vmatprep.subr.mxu0 0.0
      %1935 = vmatpush1.msra.mxu0 0.0
      %1936 = vmatprep.subr.mxu0 0.0
      %1937 = vmatpush1.msra.mxu0 0.0
      %1938 = vmatprep.subr.mxu0 0.0
      %1939 = vmatpush1.msra.mxu0 0.0
      %1940 = vmatprep.subr.mxu0 0.0
      %1941 = vmatpush1.msra.mxu0 0.0
      %1942 = vmatprep.subr.mxu0 0.0
      %1943 = vmatpush1.msra.mxu0 0.0
      %1944 = vmatprep.subr.mxu0 0.0
      %1945 = vmatpush1.msra.mxu0 0.0
      %1946 = vmatprep.subr.mxu0 0.0
      %1947 = vmatpush1.msra.mxu0 0.0
      %1948 = vmatprep.subr.mxu0 0.0
      %1949 = vmatpush1.msra.mxu0 0.0
      %1950 = vmatprep.subr.mxu0 0.0
      %1951 = vmatpush1.msra.mxu0 0.0
      %1952 = vmatprep.subr.mxu0 0.0
      %1953 = vmatpush1.msra.mxu0 0.0
      %1954 = vmatprep.subr.mxu0 0.0
      %1955 = vmatpush1.msra.mxu0 0.0
      %1956 = vmatprep.subr.mxu0 0.0
      %1957 = vmatpush1.msra.mxu0 0.0
      %1958 = vmatprep.subr.mxu0 0.0
      %1959 = vmatpush1.msra.mxu0 0.0
      %1960 = vmatprep.subr.mxu0 0.0
      %1961 = vmatpush1.msra.mxu0 0.0
      %1962 = vmatprep.subr.mxu0 0.0
      %1963 = vmatpush1.msra.mxu0 0.0
      %1964 = vmatprep.subr.mxu0 0.0
      %1965 = vmatpush1.msra.mxu0 0.0
      %1966 = vmatprep.subr.mxu0 0.0
      %1967 = vmatpush1.msra.mxu0 0.0
      %1968 = vmatprep.subr.mxu0 0.0
      %1969 = vmatpush1.msra.mxu0 0.0
      %1970 = vmatprep.subr.mxu0 0.0
      %1971 = vmatpush1.msra.mxu0 0.0
      %1972 = vmatprep.mubr.f32.mxu0 0.0
      %v1973 = vand.u32 %v1401, 4294901760
      %1974 = vmatmul.mubr.f32.gmra.mrb[0].mxu0 %v1973
      %v1975 = vpop.f32.mrb[0].mxu0
      %v1976 = vadd.f32 %v1885, %v1975
      %v1977 = vpop.f32.mrb[0].mxu0
      %1978 = vmatprep.mubr.f32.mxu0 0.0
      %v1979 = vand.u32 %v1403, 4294901760
      %1980 = vmatmul.mubr.f32.gmra.mrb[0].mxu0 %v1979
      %v1981 = vpop.f32.mrb[0].mxu0
      %v1982 = vadd.f32 %v1891, %v1981
      %v1983 = vpop.f32.mrb[0].mxu0
      %1984 = vmatprep.mubr.f32.mxu0 0.0
      %v1985 = vand.u32 %v1405, 4294901760
      %1986 = vmatmul.mubr.f32.gmra.mrb[0].mxu0 %v1985
      %v1987 = vpop.f32.mrb[0].mxu0
      %v1988 = vadd.f32 %v1897, %v1987
      %v1989 = vpop.f32.mrb[0].mxu0
      %1990 = vmatprep.mubr.f32.mxu0 0.0
      %v1991 = vand.u32 %v1407, 4294901760
      %1992 = vmatmul.mubr.f32.gmra.mrb[0].mxu0 %v1991
      %v1993 = vpop.f32.mrb[0].mxu0
      %v1994 = vadd.f32 %v1903, %v1993
      %v1995 = vpop.f32.mrb[0].mxu0
      %1996 = vdwg.mxu0
      %s1997 = scalar_lea.vmem %s174, 64
      %1998 = vst.msk [vmem:[%s1997] sm:$0xff] %vm782, %v1976
      %1999 = vst.msk [vmem:[%s1997 + $0x8] sm:$0xff] %vm782, %v1982
      %2000 = vst.msk [vmem:[%s1997 + $0x10] sm:$0xff] %vm782, %v1988
      %2001 = vst.msk [vmem:[%s1997 + $0x18] sm:$0xff] %vm782, %v1994
      %v2002 = vld [vmem:[%s787] sm:$0xff]
      %v2003 = vld [vmem:[%s787 + $0x8] sm:$0xff]
      %2004 = vmatprep.subr.mxu0 0.0
      %v2005 = vand.u32 %v2002, 4294901760
      %2006 = vmatpush1.msra.mxu0 %v2005
      %2007 = vmatprep.subr.mxu0 0.0
      %v2008 = vand.u32 %v2003, 4294901760
      %2009 = vmatpush1.msra.mxu0 %v2008
      %2010 = vmatprep.subr.mxu0 0.0
      %2011 = vmatpush1.msra.mxu0 0.0
      %2012 = vmatprep.subr.mxu0 0.0
      %2013 = vmatpush1.msra.mxu0 0.0
      %2014 = vmatprep.subr.mxu0 0.0
      %2015 = vmatpush1.msra.mxu0 0.0
      %2016 = vmatprep.subr.mxu0 0.0
      %2017 = vmatpush1.msra.mxu0 0.0
      %2018 = vmatprep.subr.mxu0 0.0
      %2019 = vmatpush1.msra.mxu0 0.0
      %2020 = vmatprep.subr.mxu0 0.0
      %2021 = vmatpush1.msra.mxu0 0.0
      %2022 = vmatprep.subr.mxu0 0.0
      %2023 = vmatpush1.msra.mxu0 0.0
      %2024 = vmatprep.subr.mxu0 0.0
      %2025 = vmatpush1.msra.mxu0 0.0
      %2026 = vmatprep.subr.mxu0 0.0
      %2027 = vmatpush1.msra.mxu0 0.0
      %2028 = vmatprep.subr.mxu0 0.0
      %2029 = vmatpush1.msra.mxu0 0.0
      %2030 = vmatprep.subr.mxu0 0.0
      %2031 = vmatpush1.msra.mxu0 0.0
      %2032 = vmatprep.subr.mxu0 0.0
      %2033 = vmatpush1.msra.mxu0 0.0
      %2034 = vmatprep.subr.mxu0 0.0
      %2035 = vmatpush1.msra.mxu0 0.0
      %2036 = vmatprep.subr.mxu0 0.0
      %2037 = vmatpush1.msra.mxu0 0.0
      %2038 = vmatprep.subr.mxu0 0.0
      %2039 = vmatpush1.msra.mxu0 0.0
      %2040 = vmatprep.subr.mxu0 0.0
      %2041 = vmatpush1.msra.mxu0 0.0
      %2042 = vmatprep.subr.mxu0 0.0
      %2043 = vmatpush1.msra.mxu0 0.0
      %2044 = vmatprep.subr.mxu0 0.0
      %2045 = vmatpush1.msra.mxu0 0.0
      %2046 = vmatprep.subr.mxu0 0.0
      %2047 = vmatpush1.msra.mxu0 0.0
      %2048 = vmatprep.subr.mxu0 0.0
      %2049 = vmatpush1.msra.mxu0 0.0
      %2050 = vmatprep.subr.mxu0 0.0
      %2051 = vmatpush1.msra.mxu0 0.0
      %2052 = vmatprep.subr.mxu0 0.0
      %2053 = vmatpush1.msra.mxu0 0.0
      %2054 = vmatprep.subr.mxu0 0.0
      %2055 = vmatpush1.msra.mxu0 0.0
      %2056 = vmatprep.subr.mxu0 0.0
      %2057 = vmatpush1.msra.mxu0 0.0
      %2058 = vmatprep.subr.mxu0 0.0
      %2059 = vmatpush1.msra.mxu0 0.0
      %2060 = vmatprep.subr.mxu0 0.0
      %2061 = vmatpush1.msra.mxu0 0.0
      %2062 = vmatprep.subr.mxu0 0.0
      %2063 = vmatpush1.msra.mxu0 0.0
      %2064 = vmatprep.subr.mxu0 0.0
      %2065 = vmatpush1.msra.mxu0 0.0
      %2066 = vmatprep.subr.mxu0 0.0
      %2067 = vmatpush1.msra.mxu0 0.0
      %2068 = vmatprep.subr.mxu0 0.0
      %2069 = vmatpush1.msra.mxu0 0.0
      %2070 = vmatprep.mubr.f32.mxu0 0.0
      %v2071 = vand.u32 %v1401, 4294901760
      %v2072 = vsub.f32 %v1401, %v2071
      %v2073 = vand.u32 %v2072, 4294901760
      %v2074 = vsub.f32 %v2072, %v2073
      %v2075 = vand.u32 %v2074, 4294901760
      %2076 = vmatmul.mubr.f32.gmra.mrb[0].mxu0 %v2075
      %v2077 = vpop.f32.mrb[0].mxu0
      %v2078 = vadd.f32 0.0, %v2077
      %v2079 = vpop.f32.mrb[0].mxu0
      %2080 = vmatprep.mubr.f32.mxu0 0.0
      %v2081 = vand.u32 %v1403, 4294901760
      %v2082 = vsub.f32 %v1403, %v2081
      %v2083 = vand.u32 %v2082, 4294901760
      %v2084 = vsub.f32 %v2082, %v2083
      %v2085 = vand.u32 %v2084, 4294901760
      %2086 = vmatmul.mubr.f32.gmra.mrb[0].mxu0 %v2085
      %v2087 = vpop.f32.mrb[0].mxu0
      %v2088 = vadd.f32 0.0, %v2087
      %v2089 = vpop.f32.mrb[0].mxu0
      %2090 = vmatprep.mubr.f32.mxu0 0.0
      %v2091 = vand.u32 %v1405, 4294901760
      %v2092 = vsub.f32 %v1405, %v2091
      %v2093 = vand.u32 %v2092, 4294901760
      %v2094 = vsub.f32 %v2092, %v2093
      %v2095 = vand.u32 %v2094, 4294901760
      %2096 = vmatmul.mubr.f32.gmra.mrb[0].mxu0 %v2095
      %v2097 = vpop.f32.mrb[0].mxu0
      %v2098 = vadd.f32 0.0, %v2097
      %v2099 = vpop.f32.mrb[0].mxu0
      %2100 = vmatprep.mubr.f32.mxu0 0.0
      %v2101 = vand.u32 %v1407, 4294901760
      %v2102 = vsub.f32 %v1407, %v2101
      %v2103 = vand.u32 %v2102, 4294901760
      %v2104 = vsub.f32 %v2102, %v2103
      %v2105 = vand.u32 %v2104, 4294901760
      %2106 = vmatmul.mubr.f32.gmra.mrb[0].mxu0 %v2105
      %v2107 = vpop.f32.mrb[0].mxu0
      %v2108 = vadd.f32 0.0, %v2107
      %v2109 = vpop.f32.mrb[0].mxu0
      %2110 = vdwg.mxu0
      %2111 = vmatprep.subr.mxu0 0.0
      %v2112 = vand.u32 %v2002, 4294901760
      %v2113 = vsub.f32 %v2002, %v2112
      %v2114 = vand.u32 %v2113, 4294901760
      %v2115 = vsub.f32 %v2113, %v2114
      %v2116 = vand.u32 %v2115, 4294901760
      %2117 = vmatpush1.msra.mxu0 %v2116
      %2118 = vmatprep.subr.mxu0 0.0
      %v2119 = vand.u32 %v2003, 4294901760
      %v2120 = vsub.f32 %v2003, %v2119
      %v2121 = vand.u32 %v2120, 4294901760
      %v2122 = vsub.f32 %v2120, %v2121
      %v2123 = vand.u32 %v2122, 4294901760
      %2124 = vmatpush1.msra.mxu0 %v2123
      %2125 = vmatprep.subr.mxu0 0.0
      %2126 = vmatpush1.msra.mxu0 0.0
      %2127 = vmatprep.subr.mxu0 0.0
      %2128 = vmatpush1.msra.mxu0 0.0
      %2129 = vmatprep.subr.mxu0 0.0
      %2130 = vmatpush1.msra.mxu0 0.0
      %2131 = vmatprep.subr.mxu0 0.0
      %2132 = vmatpush1.msra.mxu0 0.0
      %2133 = vmatprep.subr.mxu0 0.0
      %2134 = vmatpush1.msra.mxu0 0.0
      %2135 = vmatprep.subr.mxu0 0.0
      %2136 = vmatpush1.msra.mxu0 0.0
      %2137 = vmatprep.subr.mxu0 0.0
      %2138 = vmatpush1.msra.mxu0 0.0
      %2139 = vmatprep.subr.mxu0 0.0
      %2140 = vmatpush1.msra.mxu0 0.0
      %2141 = vmatprep.subr.mxu0 0.0
      %2142 = vmatpush1.msra.mxu0 0.0
      %2143 = vmatprep.subr.mxu0 0.0
      %2144 = vmatpush1.msra.mxu0 0.0
      %2145 = vmatprep.subr.mxu0 0.0
      %2146 = vmatpush1.msra.mxu0 0.0
      %2147 = vmatprep.subr.mxu0 0.0
      %2148 = vmatpush1.msra.mxu0 0.0
      %2149 = vmatprep.subr.mxu0 0.0
      %2150 = vmatpush1.msra.mxu0 0.0
      %2151 = vmatprep.subr.mxu0 0.0
      %2152 = vmatpush1.msra.mxu0 0.0
      %2153 = vmatprep.subr.mxu0 0.0
      %2154 = vmatpush1.msra.mxu0 0.0
      %2155 = vmatprep.subr.mxu0 0.0
      %2156 = vmatpush1.msra.mxu0 0.0
      %2157 = vmatprep.subr.mxu0 0.0
      %2158 = vmatpush1.msra.mxu0 0.0
      %2159 = vmatprep.subr.mxu0 0.0
      %2160 = vmatpush1.msra.mxu0 0.0
      %2161 = vmatprep.subr.mxu0 0.0
      %2162 = vmatpush1.msra.mxu0 0.0
      %2163 = vmatprep.subr.mxu0 0.0
      %2164 = vmatpush1.msra.mxu0 0.0
      %2165 = vmatprep.subr.mxu0 0.0
      %2166 = vmatpush1.msra.mxu0 0.0
      %2167 = vmatprep.subr.mxu0 0.0
      %2168 = vmatpush1.msra.mxu0 0.0
      %2169 = vmatprep.subr.mxu0 0.0
      %2170 = vmatpush1.msra.mxu0 0.0
      %2171 = vmatprep.subr.mxu0 0.0
      %2172 = vmatpush1.msra.mxu0 0.0
      %2173 = vmatprep.subr.mxu0 0.0
      %2174 = vmatpush1.msra.mxu0 0.0
      %2175 = vmatprep.subr.mxu0 0.0
      %2176 = vmatpush1.msra.mxu0 0.0
      %2177 = vmatprep.subr.mxu0 0.0
      %2178 = vmatpush1.msra.mxu0 0.0
      %2179 = vmatprep.subr.mxu0 0.0
      %2180 = vmatpush1.msra.mxu0 0.0
      %2181 = vmatprep.subr.mxu0 0.0
      %2182 = vmatpush1.msra.mxu0 0.0
      %2183 = vmatprep.subr.mxu0 0.0
      %2184 = vmatpush1.msra.mxu0 0.0
      %2185 = vmatprep.mubr.f32.mxu0 0.0
      %v2186 = vand.u32 %v1401, 4294901760
      %2187 = vmatmul.mubr.f32.gmra.mrb[0].mxu0 %v2186
      %v2188 = vpop.f32.mrb[0].mxu0
      %v2189 = vadd.f32 %v2078, %v2188
      %v2190 = vpop.f32.mrb[0].mxu0
      %2191 = vmatprep.mubr.f32.mxu0 0.0
      %v2192 = vand.u32 %v1403, 4294901760
      %2193 = vmatmul.mubr.f32.gmra.mrb[0].mxu0 %v2192
      %v2194 = vpop.f32.mrb[0].mxu0
      %v2195 = vadd.f32 %v2088, %v2194
      %v2196 = vpop.f32.mrb[0].mxu0
      %2197 = vmatprep.mubr.f32.mxu0 0.0
      %v2198 = vand.u32 %v1405, 4294901760
      %2199 = vmatmul.mubr.f32.gmra.mrb[0].mxu0 %v2198
      %v2200 = vpop.f32.mrb[0].mxu0
      %v2201 = vadd.f32 %v2098, %v2200
      %v2202 = vpop.f32.mrb[0].mxu0
      %2203 = vmatprep.mubr.f32.mxu0 0.0
      %v2204 = vand.u32 %v1407, 4294901760
      %2205 = vmatmul.mubr.f32.gmra.mrb[0].mxu0 %v2204
      %v2206 = vpop.f32.mrb[0].mxu0
      %v2207 = vadd.f32 %v2108, %v2206
      %v2208 = vpop.f32.mrb[0].mxu0
      %2209 = vdwg.mxu0
      %2210 = vmatprep.subr.mxu0 0.0
      %v2211 = vand.u32 %v2002, 4294901760
      %v2212 = vsub.f32 %v2002, %v2211
      %2213 = vmatpush1.msra.mxu0 %v2212
      %2214 = vmatprep.subr.mxu0 0.0
      %v2215 = vand.u32 %v2003, 4294901760
      %v2216 = vsub.f32 %v2003, %v2215
      %2217 = vmatpush1.msra.mxu0 %v2216
      %2218 = vmatprep.subr.mxu0 0.0
      %2219 = vmatpush1.msra.mxu0 0.0
      %2220 = vmatprep.subr.mxu0 0.0
      %2221 = vmatpush1.msra.mxu0 0.0
      %2222 = vmatprep.subr.mxu0 0.0
      %2223 = vmatpush1.msra.mxu0 0.0
      %2224 = vmatprep.subr.mxu0 0.0
      %2225 = vmatpush1.msra.mxu0 0.0
      %2226 = vmatprep.subr.mxu0 0.0
      %2227 = vmatpush1.msra.mxu0 0.0
      %2228 = vmatprep.subr.mxu0 0.0
      %2229 = vmatpush1.msra.mxu0 0.0
      %2230 = vmatprep.subr.mxu0 0.0
      %2231 = vmatpush1.msra.mxu0 0.0
      %2232 = vmatprep.subr.mxu0 0.0
      %2233 = vmatpush1.msra.mxu0 0.0
      %2234 = vmatprep.subr.mxu0 0.0
      %2235 = vmatpush1.msra.mxu0 0.0
      %2236 = vmatprep.subr.mxu0 0.0
      %2237 = vmatpush1.msra.mxu0 0.0
      %2238 = vmatprep.subr.mxu0 0.0
      %2239 = vmatpush1.msra.mxu0 0.0
      %2240 = vmatprep.subr.mxu0 0.0
      %2241 = vmatpush1.msra.mxu0 0.0
      %2242 = vmatprep.subr.mxu0 0.0
      %2243 = vmatpush1.msra.mxu0 0.0
      %2244 = vmatprep.subr.mxu0 0.0
      %2245 = vmatpush1.msra.mxu0 0.0
      %2246 = vmatprep.subr.mxu0 0.0
      %2247 = vmatpush1.msra.mxu0 0.0
      %2248 = vmatprep.subr.mxu0 0.0
      %2249 = vmatpush1.msra.mxu0 0.0
      %2250 = vmatprep.subr.mxu0 0.0
      %2251 = vmatpush1.msra.mxu0 0.0
      %2252 = vmatprep.subr.mxu0 0.0
      %2253 = vmatpush1.msra.mxu0 0.0
      %2254 = vmatprep.subr.mxu0 0.0
      %2255 = vmatpush1.msra.mxu0 0.0
      %2256 = vmatprep.subr.mxu0 0.0
      %2257 = vmatpush1.msra.mxu0 0.0
      %2258 = vmatprep.subr.mxu0 0.0
      %2259 = vmatpush1.msra.mxu0 0.0
      %2260 = vmatprep.subr.mxu0 0.0
      %2261 = vmatpush1.msra.mxu0 0.0
      %2262 = vmatprep.subr.mxu0 0.0
      %2263 = vmatpush1.msra.mxu0 0.0
      %2264 = vmatprep.subr.mxu0 0.0
      %2265 = vmatpush1.msra.mxu0 0.0
      %2266 = vmatprep.subr.mxu0 0.0
      %2267 = vmatpush1.msra.mxu0 0.0
      %2268 = vmatprep.subr.mxu0 0.0
      %2269 = vmatpush1.msra.mxu0 0.0
      %2270 = vmatprep.subr.mxu0 0.0
      %2271 = vmatpush1.msra.mxu0 0.0
      %2272 = vmatprep.subr.mxu0 0.0
      %2273 = vmatpush1.msra.mxu0 0.0
      %2274 = vmatprep.subr.mxu0 0.0
      %2275 = vmatpush1.msra.mxu0 0.0
      %2276 = vmatprep.subr.mxu0 0.0
      %2277 = vmatpush1.msra.mxu0 0.0
      %2278 = vmatprep.mubr.f32.mxu0 0.0
      %v2279 = vand.u32 %v1401, 4294901760
      %v2280 = vsub.f32 %v1401, %v2279
      %2281 = vmatmul.mubr.f32.gmra.mrb[0].mxu0 %v2280
      %v2282 = vpop.f32.mrb[0].mxu0
      %v2283 = vadd.f32 %v2189, %v2282
      %v2284 = vpop.f32.mrb[0].mxu0
      %2285 = vmatprep.mubr.f32.mxu0 0.0
      %v2286 = vand.u32 %v1403, 4294901760
      %v2287 = vsub.f32 %v1403, %v2286
      %2288 = vmatmul.mubr.f32.gmra.mrb[0].mxu0 %v2287
      %v2289 = vpop.f32.mrb[0].mxu0
      %v2290 = vadd.f32 %v2195, %v2289
      %v2291 = vpop.f32.mrb[0].mxu0
      %2292 = vmatprep.mubr.f32.mxu0 0.0
      %v2293 = vand.u32 %v1405, 4294901760
      %v2294 = vsub.f32 %v1405, %v2293
      %2295 = vmatmul.mubr.f32.gmra.mrb[0].mxu0 %v2294
      %v2296 = vpop.f32.mrb[0].mxu0
      %v2297 = vadd.f32 %v2201, %v2296
      %v2298 = vpop.f32.mrb[0].mxu0
      %2299 = vmatprep.mubr.f32.mxu0 0.0
      %v2300 = vand.u32 %v1407, 4294901760
      %v2301 = vsub.f32 %v1407, %v2300
      %2302 = vmatmul.mubr.f32.gmra.mrb[0].mxu0 %v2301
      %v2303 = vpop.f32.mrb[0].mxu0
      %v2304 = vadd.f32 %v2207, %v2303
      %v2305 = vpop.f32.mrb[0].mxu0
      %2306 = vdwg.mxu0
      %2307 = vmatprep.subr.mxu0 0.0
      %v2308 = vand.u32 %v2002, 4294901760
      %2309 = vmatpush1.msra.mxu0 %v2308
      %2310 = vmatprep.subr.mxu0 0.0
      %v2311 = vand.u32 %v2003, 4294901760
      %2312 = vmatpush1.msra.mxu0 %v2311
      %2313 = vmatprep.subr.mxu0 0.0
      %2314 = vmatpush1.msra.mxu0 0.0
      %2315 = vmatprep.subr.mxu0 0.0
      %2316 = vmatpush1.msra.mxu0 0.0
      %2317 = vmatprep.subr.mxu0 0.0
      %2318 = vmatpush1.msra.mxu0 0.0
      %2319 = vmatprep.subr.mxu0 0.0
      %2320 = vmatpush1.msra.mxu0 0.0
      %2321 = vmatprep.subr.mxu0 0.0
      %2322 = vmatpush1.msra.mxu0 0.0
      %2323 = vmatprep.subr.mxu0 0.0
      %2324 = vmatpush1.msra.mxu0 0.0
      %2325 = vmatprep.subr.mxu0 0.0
      %2326 = vmatpush1.msra.mxu0 0.0
      %2327 = vmatprep.subr.mxu0 0.0
      %2328 = vmatpush1.msra.mxu0 0.0
      %2329 = vmatprep.subr.mxu0 0.0
      %2330 = vmatpush1.msra.mxu0 0.0
      %2331 = vmatprep.subr.mxu0 0.0
      %2332 = vmatpush1.msra.mxu0 0.0
      %2333 = vmatprep.subr.mxu0 0.0
      %2334 = vmatpush1.msra.mxu0 0.0
      %2335 = vmatprep.subr.mxu0 0.0
      %2336 = vmatpush1.msra.mxu0 0.0
      %2337 = vmatprep.subr.mxu0 0.0
      %2338 = vmatpush1.msra.mxu0 0.0
      %2339 = vmatprep.subr.mxu0 0.0
      %2340 = vmatpush1.msra.mxu0 0.0
      %2341 = vmatprep.subr.mxu0 0.0
      %2342 = vmatpush1.msra.mxu0 0.0
      %2343 = vmatprep.subr.mxu0 0.0
      %2344 = vmatpush1.msra.mxu0 0.0
      %2345 = vmatprep.subr.mxu0 0.0
      %2346 = vmatpush1.msra.mxu0 0.0
      %2347 = vmatprep.subr.mxu0 0.0
      %2348 = vmatpush1.msra.mxu0 0.0
      %2349 = vmatprep.subr.mxu0 0.0
      %2350 = vmatpush1.msra.mxu0 0.0
      %2351 = vmatprep.subr.mxu0 0.0
      %2352 = vmatpush1.msra.mxu0 0.0
      %2353 = vmatprep.subr.mxu0 0.0
      %2354 = vmatpush1.msra.mxu0 0.0
      %2355 = vmatprep.subr.mxu0 0.0
      %2356 = vmatpush1.msra.mxu0 0.0
      %2357 = vmatprep.subr.mxu0 0.0
      %2358 = vmatpush1.msra.mxu0 0.0
      %2359 = vmatprep.subr.mxu0 0.0
      %2360 = vmatpush1.msra.mxu0 0.0
      %2361 = vmatprep.subr.mxu0 0.0
      %2362 = vmatpush1.msra.mxu0 0.0
      %2363 = vmatprep.subr.mxu0 0.0
      %2364 = vmatpush1.msra.mxu0 0.0
      %2365 = vmatprep.subr.mxu0 0.0
      %2366 = vmatpush1.msra.mxu0 0.0
      %2367 = vmatprep.subr.mxu0 0.0
      %2368 = vmatpush1.msra.mxu0 0.0
      %2369 = vmatprep.subr.mxu0 0.0
      %2370 = vmatpush1.msra.mxu0 0.0
      %2371 = vmatprep.subr.mxu0 0.0
      %2372 = vmatpush1.msra.mxu0 0.0
      %2373 = vmatprep.mubr.f32.mxu0 0.0
      %v2374 = vand.u32 %v1401, 4294901760
      %v2375 = vsub.f32 %v1401, %v2374
      %v2376 = vand.u32 %v2375, 4294901760
      %2377 = vmatmul.mubr.f32.gmra.mrb[0].mxu0 %v2376
      %v2378 = vpop.f32.mrb[0].mxu0
      %v2379 = vadd.f32 %v2283, %v2378
      %v2380 = vpop.f32.mrb[0].mxu0
      %2381 = vmatprep.mubr.f32.mxu0 0.0
      %v2382 = vand.u32 %v1403, 4294901760
      %v2383 = vsub.f32 %v1403, %v2382
      %v2384 = vand.u32 %v2383, 4294901760
      %2385 = vmatmul.mubr.f32.gmra.mrb[0].mxu0 %v2384
      %v2386 = vpop.f32.mrb[0].mxu0
      %v2387 = vadd.f32 %v2290, %v2386
      %v2388 = vpop.f32.mrb[0].mxu0
      %2389 = vmatprep.mubr.f32.mxu0 0.0
      %v2390 = vand.u32 %v1405, 4294901760
      %v2391 = vsub.f32 %v1405, %v2390
      %v2392 = vand.u32 %v2391, 4294901760
      %2393 = vmatmul.mubr.f32.gmra.mrb[0].mxu0 %v2392
      %v2394 = vpop.f32.mrb[0].mxu0
      %v2395 = vadd.f32 %v2297, %v2394
      %v2396 = vpop.f32.mrb[0].mxu0
      %2397 = vmatprep.mubr.f32.mxu0 0.0
      %v2398 = vand.u32 %v1407, 4294901760
      %v2399 = vsub.f32 %v1407, %v2398
      %v2400 = vand.u32 %v2399, 4294901760
      %2401 = vmatmul.mubr.f32.gmra.mrb[0].mxu0 %v2400
      %v2402 = vpop.f32.mrb[0].mxu0
      %v2403 = vadd.f32 %v2304, %v2402
      %v2404 = vpop.f32.mrb[0].mxu0
      %2405 = vdwg.mxu0
      %2406 = vmatprep.subr.mxu0 0.0
      %v2407 = vand.u32 %v2002, 4294901760
      %v2408 = vsub.f32 %v2002, %v2407
      %v2409 = vand.u32 %v2408, 4294901760
      %2410 = vmatpush1.msra.mxu0 %v2409
      %2411 = vmatprep.subr.mxu0 0.0
      %v2412 = vand.u32 %v2003, 4294901760
      %v2413 = vsub.f32 %v2003, %v2412
      %v2414 = vand.u32 %v2413, 4294901760
      %2415 = vmatpush1.msra.mxu0 %v2414
      %2416 = vmatprep.subr.mxu0 0.0
      %2417 = vmatpush1.msra.mxu0 0.0
      %2418 = vmatprep.subr.mxu0 0.0
      %2419 = vmatpush1.msra.mxu0 0.0
      %2420 = vmatprep.subr.mxu0 0.0
      %2421 = vmatpush1.msra.mxu0 0.0
      %2422 = vmatprep.subr.mxu0 0.0
      %2423 = vmatpush1.msra.mxu0 0.0
      %2424 = vmatprep.subr.mxu0 0.0
      %2425 = vmatpush1.msra.mxu0 0.0
      %2426 = vmatprep.subr.mxu0 0.0
      %2427 = vmatpush1.msra.mxu0 0.0
      %2428 = vmatprep.subr.mxu0 0.0
      %2429 = vmatpush1.msra.mxu0 0.0
      %2430 = vmatprep.subr.mxu0 0.0
      %2431 = vmatpush1.msra.mxu0 0.0
      %2432 = vmatprep.subr.mxu0 0.0
      %2433 = vmatpush1.msra.mxu0 0.0
      %2434 = vmatprep.subr.mxu0 0.0
      %2435 = vmatpush1.msra.mxu0 0.0
      %2436 = vmatprep.subr.mxu0 0.0
      %2437 = vmatpush1.msra.mxu0 0.0
      %2438 = vmatprep.subr.mxu0 0.0
      %2439 = vmatpush1.msra.mxu0 0.0
      %2440 = vmatprep.subr.mxu0 0.0
      %2441 = vmatpush1.msra.mxu0 0.0
      %2442 = vmatprep.subr.mxu0 0.0
      %2443 = vmatpush1.msra.mxu0 0.0
      %2444 = vmatprep.subr.mxu0 0.0
      %2445 = vmatpush1.msra.mxu0 0.0
      %2446 = vmatprep.subr.mxu0 0.0
      %2447 = vmatpush1.msra.mxu0 0.0
      %2448 = vmatprep.subr.mxu0 0.0
      %2449 = vmatpush1.msra.mxu0 0.0
      %2450 = vmatprep.subr.mxu0 0.0
      %2451 = vmatpush1.msra.mxu0 0.0
      %2452 = vmatprep.subr.mxu0 0.0
      %2453 = vmatpush1.msra.mxu0 0.0
      %2454 = vmatprep.subr.mxu0 0.0
      %2455 = vmatpush1.msra.mxu0 0.0
      %2456 = vmatprep.subr.mxu0 0.0
      %2457 = vmatpush1.msra.mxu0 0.0
      %2458 = vmatprep.subr.mxu0 0.0
      %2459 = vmatpush1.msra.mxu0 0.0
      %2460 = vmatprep.subr.mxu0 0.0
      %2461 = vmatpush1.msra.mxu0 0.0
      %2462 = vmatprep.subr.mxu0 0.0
      %2463 = vmatpush1.msra.mxu0 0.0
      %2464 = vmatprep.subr.mxu0 0.0
      %2465 = vmatpush1.msra.mxu0 0.0
      %2466 = vmatprep.subr.mxu0 0.0
      %2467 = vmatpush1.msra.mxu0 0.0
      %2468 = vmatprep.subr.mxu0 0.0
      %2469 = vmatpush1.msra.mxu0 0.0
      %2470 = vmatprep.subr.mxu0 0.0
      %2471 = vmatpush1.msra.mxu0 0.0
      %2472 = vmatprep.subr.mxu0 0.0
      %2473 = vmatpush1.msra.mxu0 0.0
      %2474 = vmatprep.subr.mxu0 0.0
      %2475 = vmatpush1.msra.mxu0 0.0
      %2476 = vmatprep.mubr.f32.mxu0 0.0
      %v2477 = vand.u32 %v1401, 4294901760
      %2478 = vmatmul.mubr.f32.gmra.mrb[0].mxu0 %v2477
      %v2479 = vpop.f32.mrb[0].mxu0
      %v2480 = vadd.f32 %v2379, %v2479
      %v2481 = vpop.f32.mrb[0].mxu0
      %2482 = vmatprep.mubr.f32.mxu0 0.0
      %v2483 = vand.u32 %v1403, 4294901760
      %2484 = vmatmul.mubr.f32.gmra.mrb[0].mxu0 %v2483
      %v2485 = vpop.f32.mrb[0].mxu0
      %v2486 = vadd.f32 %v2387, %v2485
      %v2487 = vpop.f32.mrb[0].mxu0
      %2488 = vmatprep.mubr.f32.mxu0 0.0
      %v2489 = vand.u32 %v1405, 4294901760
      %2490 = vmatmul.mubr.f32.gmra.mrb[0].mxu0 %v2489
      %v2491 = vpop.f32.mrb[0].mxu0
      %v2492 = vadd.f32 %v2395, %v2491
      %v2493 = vpop.f32.mrb[0].mxu0
      %2494 = vmatprep.mubr.f32.mxu0 0.0
      %v2495 = vand.u32 %v1407, 4294901760
      %2496 = vmatmul.mubr.f32.gmra.mrb[0].mxu0 %v2495
      %v2497 = vpop.f32.mrb[0].mxu0
      %v2498 = vadd.f32 %v2403, %v2497
      %v2499 = vpop.f32.mrb[0].mxu0
      %2500 = vdwg.mxu0
      %2501 = vmatprep.subr.mxu0 0.0
      %v2502 = vand.u32 %v2002, 4294901760
      %2503 = vmatpush1.msra.mxu0 %v2502
      %2504 = vmatprep.subr.mxu0 0.0
      %v2505 = vand.u32 %v2003, 4294901760
      %2506 = vmatpush1.msra.mxu0 %v2505
      %2507 = vmatprep.subr.mxu0 0.0
      %2508 = vmatpush1.msra.mxu0 0.0
      %2509 = vmatprep.subr.mxu0 0.0
      %2510 = vmatpush1.msra.mxu0 0.0
      %2511 = vmatprep.subr.mxu0 0.0
      %2512 = vmatpush1.msra.mxu0 0.0
      %2513 = vmatprep.subr.mxu0 0.0
      %2514 = vmatpush1.msra.mxu0 0.0
      %2515 = vmatprep.subr.mxu0 0.0
      %2516 = vmatpush1.msra.mxu0 0.0
      %2517 = vmatprep.subr.mxu0 0.0
      %2518 = vmatpush1.msra.mxu0 0.0
      %2519 = vmatprep.subr.mxu0 0.0
      %2520 = vmatpush1.msra.mxu0 0.0
      %2521 = vmatprep.subr.mxu0 0.0
      %2522 = vmatpush1.msra.mxu0 0.0
      %2523 = vmatprep.subr.mxu0 0.0
      %2524 = vmatpush1.msra.mxu0 0.0
      %2525 = vmatprep.subr.mxu0 0.0
      %2526 = vmatpush1.msra.mxu0 0.0
      %2527 = vmatprep.subr.mxu0 0.0
      %2528 = vmatpush1.msra.mxu0 0.0
      %2529 = vmatprep.subr.mxu0 0.0
      %2530 = vmatpush1.msra.mxu0 0.0
      %2531 = vmatprep.subr.mxu0 0.0
      %2532 = vmatpush1.msra.mxu0 0.0
      %2533 = vmatprep.subr.mxu0 0.0
      %2534 = vmatpush1.msra.mxu0 0.0
      %2535 = vmatprep.subr.mxu0 0.0
      %2536 = vmatpush1.msra.mxu0 0.0
      %2537 = vmatprep.subr.mxu0 0.0
      %2538 = vmatpush1.msra.mxu0 0.0
      %2539 = vmatprep.subr.mxu0 0.0
      %2540 = vmatpush1.msra.mxu0 0.0
      %2541 = vmatprep.subr.mxu0 0.0
      %2542 = vmatpush1.msra.mxu0 0.0
      %2543 = vmatprep.subr.mxu0 0.0
      %2544 = vmatpush1.msra.mxu0 0.0
      %2545 = vmatprep.subr.mxu0 0.0
      %2546 = vmatpush1.msra.mxu0 0.0
      %2547 = vmatprep.subr.mxu0 0.0
      %2548 = vmatpush1.msra.mxu0 0.0
      %2549 = vmatprep.subr.mxu0 0.0
      %2550 = vmatpush1.msra.mxu0 0.0
      %2551 = vmatprep.subr.mxu0 0.0
      %2552 = vmatpush1.msra.mxu0 0.0
      %2553 = vmatprep.subr.mxu0 0.0
      %2554 = vmatpush1.msra.mxu0 0.0
      %2555 = vmatprep.subr.mxu0 0.0
      %2556 = vmatpush1.msra.mxu0 0.0
      %2557 = vmatprep.subr.mxu0 0.0
      %2558 = vmatpush1.msra.mxu0 0.0
      %2559 = vmatprep.subr.mxu0 0.0
      %2560 = vmatpush1.msra.mxu0 0.0
      %2561 = vmatprep.subr.mxu0 0.0
      %2562 = vmatpush1.msra.mxu0 0.0
      %2563 = vmatprep.subr.mxu0 0.0
      %2564 = vmatpush1.msra.mxu0 0.0
      %2565 = vmatprep.subr.mxu0 0.0
      %2566 = vmatpush1.msra.mxu0 0.0
      %2567 = vmatprep.mubr.f32.mxu0 0.0
      %v2568 = vand.u32 %v1401, 4294901760
      %2569 = vmatmul.mubr.f32.gmra.mrb[0].mxu0 %v2568
      %v2570 = vpop.f32.mrb[0].mxu0
      %v2571 = vadd.f32 %v2480, %v2570
      %v2572 = vpop.f32.mrb[0].mxu0
      %2573 = vmatprep.mubr.f32.mxu0 0.0
      %v2574 = vand.u32 %v1403, 4294901760
      %2575 = vmatmul.mubr.f32.gmra.mrb[0].mxu0 %v2574
      %v2576 = vpop.f32.mrb[0].mxu0
      %v2577 = vadd.f32 %v2486, %v2576
      %v2578 = vpop.f32.mrb[0].mxu0
      %2579 = vmatprep.mubr.f32.mxu0 0.0
      %v2580 = vand.u32 %v1405, 4294901760
      %2581 = vmatmul.mubr.f32.gmra.mrb[0].mxu0 %v2580
      %v2582 = vpop.f32.mrb[0].mxu0
      %v2583 = vadd.f32 %v2492, %v2582
      %v2584 = vpop.f32.mrb[0].mxu0
      %2585 = vmatprep.mubr.f32.mxu0 0.0
      %v2586 = vand.u32 %v1407, 4294901760
      %2587 = vmatmul.mubr.f32.gmra.mrb[0].mxu0 %v2586
      %v2588 = vpop.f32.mrb[0].mxu0
      %v2589 = vadd.f32 %v2498, %v2588
      %v2590 = vpop.f32.mrb[0].mxu0
      %2591 = vdwg.mxu0
      %s2592 = scalar_lea.vmem %s174, 96
      %2593 = vst.msk [vmem:[%s2592] sm:$0xff] %vm782, %v2571
      %2594 = vst.msk [vmem:[%s2592 + $0x8] sm:$0xff] %vm782, %v2577
      %2595 = vst.msk [vmem:[%s2592 + $0x10] sm:$0xff] %vm782, %v2583
      %2596 = vst.msk [vmem:[%s2592 + $0x18] sm:$0xff] %vm782, %v2589
      %p2597 = scmp.lt.s32.totalorder %s17, 1
      %s2598 = scalar_select %p2597, %s17, 1
      %p2599 = scmp.lt.s32.totalorder %s18, 0
      %s2600 = scalar_select %p2599, %s18, 0
      %s2601 = smul.addr %s2598, 16
      %s2602 = sadd.s32 %s2600, %s2601
      %s2603 = smul.addr %s2602, 8
      %s2604 = scalar_lea.vmem %s2, %s2603
      // Predicated region
      $region29: #{down_block.1} parent=27 // pred_check
        %p2605 = pneg %p94
      $region30: #{down_block.1} parent=27 // pred_check_branch
        %2607 = sbr.rel (%p2605) target = $region32
      $region31: #{down_block.1} parent=27 // pred_region
        _
      $region32: #{down_block.1} parent=27 // pred_fallthru
        _
    $region28: #{down_block.1} parent=5 // pred_fallthru
      _
    %p2608 = scmp.le.s32.totalorder 2, %s8
    // Predicated region
    $region33: #{down_block.1} parent=5 // pred_check
      %p2609 = pneg %p2608
    $region34: #{down_block.1} parent=5 // pred_check_branch
      %2611 = sbr.rel (%p2609) target = $region36
    $region35: #{down_block.1} parent=5 // pred_region
      %s2612 = ssub.s32 %s8, 2
      // Predicated region
      $region37: #{down_block.1} parent=35 // pred_check
        %p2613 = pneg %p100
      $region38: #{down_block.1} parent=35 // pred_check_branch
        %2615 = sbr.rel (%p2613) target = $region40
      $region39: #{down_block.1} parent=35 // pred_region
        %p2616 = scmp.lt.s32.totalorder %s19, 1
        %s2617 = scalar_select %p2616, %s19, 1
        %p2618 = scmp.lt.s32.totalorder %s20, 0
        %s2619 = scalar_select %p2618, %s20, 0
        %s2620 = smul.addr %s2617, 16
        %s2621 = sadd.s32 %s2619, %s2620
        %s2622 = smul.addr %s2621, 8
        %s2623 = scalar_lea.vmem %s2, %s2622
      $region40: #{down_block.1} parent=35 // pred_fallthru
        _
    $region36: #{down_block.1} parent=5 // pred_fallthru
      _
  $region6: #{down_block.1} parent=0 // loop_footer
    %s12 = sadd.s32 1, %s8
  $region7: #{down_block.1} parent=0 // loop_footer_branch
    %7 = sbr.rel target = $region3
  $region8: #{down_block.1} parent=0 // loop_exit
    _

</llo_original>
